<compile_context>
chip_gen: v7x
topology: tpu7x:2x2x1
jax: 0.10.0
libtpu: 0.0.40
codegen_flags: <defaults>
</compile_context>

<pallas_src>
import functools

import jax
import jax.numpy as jnp
import numpy as np
from jax.experimental import pallas as pl
from jax.experimental.pallas import tpu as pltpu

K = 7             # kernel_size
P = (K - 1) // 2  # padding = 3

_VMEM_LIMIT = 32 * 1024 * 1024          # safe on v5e/v6e (128 MiB) and v7x (64 MiB phys)
_FUSED_VMEM_BUDGET = 24 * 1024 * 1024   # per-call budget gate for the fused path


def _round_up(v, m):
    return ((v + m - 1) // m) * m


# ===========================================================================
# Fused single-pass kernel: ZPool + 7x7 conv (BN folded) + sigmoid + gating
# ===========================================================================
def _make_fused_kernel(H, W, padl):
    HW = H * W

    def kernel(x_ref, w_ref, b_ref, col_ref, o_ref, zp_ref):
        # x_ref  : (1, C, HW)        one batch element, lane-dense
        # w_ref  : (2*K*K,)          BN-folded conv weights, [cin, kh, kw] order (SMEM)
        # b_ref  : (1,)              BN-folded bias (SMEM)
        # col_ref: (1, HW)           column index j of every flat position (int32)
        # o_ref  : (1, C, HW)        gated output
        # zp_ref : (2, 1, padl+HW+padl) zero-padded flat ZPool planes (VMEM scratch)
        x = x_ref[0].astype(jnp.float32)                       # (C, HW)

        # --- ZPool: channel max / mean, lane-dense -------------------------
        zmax = jnp.max(x, axis=0, keepdims=True)               # (1, HW)
        zmean = jnp.mean(x, axis=0, keepdims=True)             # (1, HW)

        # --- place into zero-padded flat planes (lane-aligned interior) ----
        # Zero every step: scratch is per-core, so do not rely on step-0 init
        # when the batch axis is split across TensorCores.
        zp_ref[...] = jnp.zeros_like(zp_ref)
        zp_ref[0, :, padl:padl + HW] = zmax
        zp_ref[1, :, padl:padl + HW] = zmean

        # --- 7x7 conv in flat space -----------------------------------------
        # Tap (kh, kw) of the zero-padded 2-D conv is the flat shift
        # (kh-P)*W + (kw-P).  Row overflow maps to indices outside [0, HW) and
        # therefore reads the zero pad; only column overflow (which stays inside
        # [0, HW) but wraps to the neighbouring row) needs masking.
        cols = col_ref[...]                                    # (1, HW) int32
        acc = jnp.full((1, HW), b_ref[0], dtype=jnp.float32)
        for ci in range(2):                                    # 0: max map, 1: mean map
            for kw in range(K):
                dx = kw - P
                part = jnp.zeros((1, HW), jnp.float32)
                for kh in range(K):
                    off = padl + (kh - P) * W + dx
                    part = part + (w_ref[ci * K * K + kh * K + kw]
                                   * zp_ref[ci, :, off:off + HW])
                if dx != 0:
                    ok = jnp.logical_and(cols + dx >= 0, cols + dx < W)
                    part = jnp.where(ok, part, 0.0)
                acc = acc + part

        scale = jax.nn.sigmoid(acc)                            # (1, HW)

        # --- gating: out = x * scale (broadcast over C) ---------------------
        o_ref[0] = (x * scale).astype(o_ref.dtype)

    return kernel


def _fused_vmem_estimate(C, H, W, itemsize):
    """Conservative per-call VMEM estimate for the fused path (double buffers +
    scratch + in-kernel f32 temporaries)."""
    HW = H * W
    padl = _round_up(P * W + P, 128)
    io_bytes = 4 * C * HW * max(itemsize, 4)       # x + out, each double-buffered
    scratch = 2 * (HW + 2 * padl) * 4
    cols = 2 * HW * 4
    temps = (C * HW + 8 * HW) * 4                  # f32 copy of x + misc temporaries
    return io_bytes + scratch + cols + temps


def _attention_gate_fused(x, w_flat, b_fold):
    B, C, H, W = x.shape
    HW = H * W
    padl = _round_up(P * W + P, 128)
    x_flat = x.reshape(B, C, HW)                   # free reshape (contiguous)
    cols = jnp.tile(jnp.arange(W, dtype=jnp.int32), H).reshape(1, HW)

    out_flat = pl.pallas_call(
        _make_fused_kernel(H, W, padl),
        out_shape=jax.ShapeDtypeStruct((B, C, HW), x.dtype),
        grid_spec=pltpu.PrefetchScalarGridSpec(
            num_scalar_prefetch=0,
            grid=(B,),
            in_specs=[
                pl.BlockSpec((1, C, HW), lambda b: (b, 0, 0)),           # x
                pl.BlockSpec(memory_space=pltpu.MemorySpace.SMEM),       # w_flat
                pl.BlockSpec(memory_space=pltpu.MemorySpace.SMEM),       # b_fold
                pl.BlockSpec((1, HW), lambda b: (0, 0)),                 # cols (resident)
            ],
            out_specs=pl.BlockSpec((1, C, HW), lambda b: (b, 0, 0)),
            scratch_shapes=[pltpu.VMEM((2, 1, HW + 2 * padl), jnp.float32)],
        ),
        compiler_params=pltpu.CompilerParams(
            dimension_semantics=("parallel",),
            vmem_limit_bytes=_VMEM_LIMIT,
        ),
    )(x_flat, w_flat, b_fold, cols)
    return out_flat.reshape(B, C, H, W)


# ===========================================================================
# Tiled fallback (large C*H*W): ZPool -> conv+sigmoid -> gate, three kernels
# ===========================================================================
def _zpool_kernel(x_ref, z_ref):
    # x_ref: (1, C, thw)  input tile
    # z_ref: (1, 2, thw)  [0] = channel max, [1] = channel mean
    x = x_ref[0].astype(jnp.float32)                       # (C, thw)
    z_ref[0, 0:1, :] = jnp.max(x, axis=0, keepdims=True)
    z_ref[0, 1:2, :] = jnp.mean(x, axis=0, keepdims=True)


def _scale_kernel(zp_ref, w_ref, b_ref, s_ref):
    # zp_ref: (1, 2, H+2P, W+2P)  zero-padded ZPool maps (VMEM)
    # w_ref : (2*K*K,)            BN-folded conv weights, [cin, kh, kw] order (SMEM)
    # b_ref : (1,)                BN-folded bias (SMEM)
    # s_ref : (1, H, W)           sigmoid gate plane for this batch element
    Hp = zp_ref.shape[2]
    Wp = zp_ref.shape[3]
    H = Hp - 2 * P
    W = Wp - 2 * P

    acc = jnp.full((H, W), b_ref[0], dtype=jnp.float32)
    for ci in range(2):                                    # 0: max map, 1: mean map
        zc = zp_ref[0, ci]                                 # (Hp, Wp)
        for kh in range(K):
            band = zc[kh:kh + H, :]                        # (H, Wp)
            part = w_ref[ci * K * K + kh * K] * band[:, 0:W]
            for kw in range(1, K):
                part = part + w_ref[ci * K * K + kh * K + kw] * band[:, kw:kw + W]
            acc = acc + part
    s_ref[0] = jax.nn.sigmoid(acc)


def _gate_kernel(s_ref, x_ref, o_ref):
    # s_ref: (1, 1, thw); x_ref: (1, C, thw); o_ref: (1, C, thw)
    x = x_ref[0].astype(jnp.float32)                       # (C, thw)
    o_ref[0] = (x * s_ref[0]).astype(o_ref.dtype)


def _pick_lane_tile(n_ch, hw, budget_bytes=2 * 1024 * 1024):
    """Lane-dim tile for (n_ch, tile) f32 blocks: full extent if small, else a
    multiple of 128 within a conservative per-block VMEM budget (v7x-safe)."""
    if hw <= 512:
        return hw
    cap = max(128, budget_bytes // (4 * max(n_ch, 1)))
    cap = min(hw, cap)
    t = max((cap // 128) * 128, 128)
    d = t
    while d >= 128:                      # prefer an exact divisor (no ragged tail)
        if hw % d == 0:
            return d
        d -= 128
    return t


def _attention_gate_tiled(x, w_flat, b_fold):
    B, C, H, W = x.shape
    HW = H * W
    x_flat = x.reshape(B, C, HW)
    thw = _pick_lane_tile(C, HW)
    n_hw = pl.cdiv(HW, thw)

    # --- 1) ZPool ----------------------------------------------------------
    z = pl.pallas_call(
        _zpool_kernel,
        out_shape=jax.ShapeDtypeStruct((B, 2, HW), jnp.float32),
        grid_spec=pltpu.PrefetchScalarGridSpec(
            num_scalar_prefetch=0,
            grid=(B, n_hw),
            in_specs=[pl.BlockSpec((1, C, thw), lambda b, t: (b, 0, t))],
            out_specs=pl.BlockSpec((1, 2, thw), lambda b, t: (b, 0, t)),
        ),
        compiler_params=pltpu.CompilerParams(
            dimension_semantics=("parallel", "parallel"),
            vmem_limit_bytes=_VMEM_LIMIT,
        ),
    )(x_flat)

    # Pad only the tiny 2-channel maps.
    zp = jnp.pad(z.reshape(B, 2, H, W), ((0, 0), (0, 0), (P, P), (P, P)))

    # --- 2) conv + sigmoid -> per-batch gate plane ---------------------------
    scale = pl.pallas_call(
        _scale_kernel,
        out_shape=jax.ShapeDtypeStruct((B, H, W), jnp.float32),
        grid_spec=pltpu.PrefetchScalarGridSpec(
            num_scalar_prefetch=0,
            grid=(B,),
            in_specs=[
                pl.BlockSpec((1, 2, H + 2 * P, W + 2 * P), lambda b: (b, 0, 0, 0)),
                pl.BlockSpec(memory_space=pltpu.MemorySpace.SMEM),   # w_flat
                pl.BlockSpec(memory_space=pltpu.MemorySpace.SMEM),   # b_fold
            ],
            out_specs=pl.BlockSpec((1, H, W), lambda b: (b, 0, 0)),
        ),
        compiler_params=pltpu.CompilerParams(
            dimension_semantics=("parallel",),
            vmem_limit_bytes=_VMEM_LIMIT,
        ),
    )(zp, w_flat, b_fold)

    scale_flat = scale.reshape(B, 1, HW)

    # --- 3) gating -----------------------------------------------------------
    out_flat = pl.pallas_call(
        _gate_kernel,
        out_shape=jax.ShapeDtypeStruct((B, C, HW), x.dtype),
        grid_spec=pltpu.PrefetchScalarGridSpec(
            num_scalar_prefetch=0,
            grid=(B, n_hw),
            in_specs=[
                pl.BlockSpec((1, 1, thw), lambda b, t: (b, 0, t)),   # scale
                pl.BlockSpec((1, C, thw), lambda b, t: (b, 0, t)),   # x
            ],
            out_specs=pl.BlockSpec((1, C, thw), lambda b, t: (b, 0, t)),
        ),
        compiler_params=pltpu.CompilerParams(
            dimension_semantics=("parallel", "parallel"),
            vmem_limit_bytes=_VMEM_LIMIT,
        ),
    )(scale_flat, x_flat)

    return out_flat.reshape(B, C, H, W)


# ===========================================================================
# Public wrapper
# ===========================================================================
@functools.partial(jax.jit, static_argnames=("force_tiled",))
def attention_gate(x, conv_w, conv_b, bn_gamma, bn_beta, bn_mean, bn_var, bn_eps,
                   *, force_tiled=False):
    """x: (B, C, H, W). conv_w: (1, 2, K, K). Returns (B, C, H, W), dtype of x."""
    B, C, H, W = x.shape

    # Fold eval-mode BatchNorm into the conv weights / bias.
    s = jnp.asarray(bn_gamma, jnp.float32) * jax.lax.rsqrt(
        jnp.asarray(bn_var, jnp.float32) + jnp.asarray(bn_eps, jnp.float32))
    w_flat = (conv_w.astype(jnp.float32) * s).reshape(-1)                  # (2*K*K,)
    b_fold = jnp.reshape((jnp.asarray(conv_b, jnp.float32) - bn_mean) * s + bn_beta,
                         (1,)).astype(jnp.float32)

    if (not force_tiled) and (
            _fused_vmem_estimate(C, H, W, x.dtype.itemsize) <= _FUSED_VMEM_BUDGET):
        return _attention_gate_fused(x, w_flat, b_fold)
    return _attention_gate_tiled(x, w_flat, b_fold)


def attention_gate_reference(x, conv_w, conv_b, bn_gamma, bn_beta, bn_mean, bn_var, bn_eps):
    """Pure-JAX reference mirroring the PyTorch forward (eval-mode BN)."""
    z = jnp.concatenate(
        [jnp.max(x, axis=1, keepdims=True), jnp.mean(x, axis=1, keepdims=True)], axis=1
    )
    conv = jax.lax.conv_general_dilated(
        z, conv_w, window_strides=(1, 1), padding=[(P, P), (P, P)],
        dimension_numbers=("NCHW", "OIHW", "NCHW"),
    ) + conv_b
    bn = (conv - bn_mean) / jnp.sqrt(bn_var + bn_eps) * bn_gamma + bn_beta
    return x * jax.nn.sigmoid(bn)


if __name__ == "__main__":
    key = jax.random.PRNGKey(0)
    kx, kw = jax.random.split(key)

    # Small validation shapes (perf should be evaluated at production B/C/H/W).
    B, C, H, W = 2, 4, 16, 16
    x = jax.random.normal(kx, (B, C, H, W), dtype=jnp.float32)

    # Deterministic synthetic parameters (nn.Conv2d(2,1,7) / BatchNorm2d(1) shapes).
    conv_w = jax.random.normal(kw, (1, 2, K, K), dtype=jnp.float32) * 0.1
    conv_b = 0.05
    bn_gamma, bn_beta = 1.0, 0.0       # BatchNorm2d default init
    bn_mean, bn_var, bn_eps = 0.0, 1.0, 1e-5

    ref = attention_gate_reference(
        x, conv_w, conv_b, bn_gamma, bn_beta, bn_mean, bn_var, bn_eps
    )
    ref = jax.block_until_ready(ref)

    # Fused single-pass path (used at these shapes).
    out = attention_gate(x, conv_w, conv_b, bn_gamma, bn_beta, bn_mean, bn_var, bn_eps)
    out = jax.block_until_ready(out)
    if not np.allclose(np.asarray(out), np.asarray(ref), rtol=1e-4, atol=1e-5):
        raise AssertionError("Pallas AttentionGate (fused path) does not match reference")

    # Also exercise the tiled fallback path (used for large C*H*W) at the same shapes.
    out_t = attention_gate(x, conv_w, conv_b, bn_gamma, bn_beta, bn_mean, bn_var, bn_eps,
                           force_tiled=True)
    out_t = jax.block_until_ready(out_t)
    if not np.allclose(np.asarray(out_t), np.asarray(ref), rtol=1e-4, atol=1e-5):
        raise AssertionError("Pallas AttentionGate (tiled path) does not match reference")

    print("KERNEL_OK")
</pallas_src>

<mosaic_0001>
module attributes {stable_mosaic.version = 11 : i64} {
  func.func @kernel(%arg0: i32, %arg1: memref<1x4x256xf32, #tpu.memory_space<vmem>>, %arg2: memref<98xf32, #tpu.memory_space<smem>>, %arg3: memref<1xf32, #tpu.memory_space<smem>>, %arg4: memref<1x256xi32, #tpu.memory_space<vmem>>, %arg5: memref<1x4x256xf32, #tpu.memory_space<vmem>>, %arg6: memref<2x1x512xf32, #tpu.memory_space<vmem>>) attributes {dimension_semantics = [#tpu.dimension_semantics<parallel>], iteration_bounds = array<i64: 2>, scalar_prefetch = 0 : i64, scratch_operands = 1 : i64, tpu.core_type = #tpu.core_type<tc>, window_params = [{transform_indices = @transform_0, window_bounds = array<i64: 1, 4, 256>}, {transform_indices = @transform_1, window_bounds = array<i64: 98>}, {transform_indices = @transform_2, window_bounds = array<i64: 1>}, {pipeline_mode = #tpu.pipeline_mode<synchronous>, transform_indices = @transform_3, window_bounds = array<i64: 1, 256>}, {transform_indices = @transform_4, window_bounds = array<i64: 1, 4, 256>}]} {
    %c0 = arith.constant 0 : index
    %c0_0 = arith.constant 0 : index
    %c0_1 = arith.constant 0 : index
    %0 = vector.load %arg1[%c0, %c0_0, %c0_1] : memref<1x4x256xf32, #tpu.memory_space<vmem>>, vector<1x4x256xf32>
    %1 = vector.shape_cast %0 : vector<1x4x256xf32> to vector<4x256xf32>
    %cst = arith.constant dense<0xFF800000> : vector<256xf32>
    %2 = vector.multi_reduction <maximumf>, %1, %cst [0] : vector<4x256xf32> to vector<256xf32>
    %3 = vector.shape_cast %2 : vector<256xf32> to vector<1x256xf32>
    %cst_2 = arith.constant dense<0.000000e+00> : vector<256xf32>
    %4 = vector.multi_reduction <add>, %1, %cst_2 [0] : vector<4x256xf32> to vector<256xf32>
    %5 = vector.shape_cast %4 : vector<256xf32> to vector<1x256xf32>
    %cst_3 = arith.constant 4.000000e+00 : f32
    %6 = vector.broadcast %cst_3 : f32 to vector<1x256xf32>
    %7 = arith.divf %5, %6 : vector<1x256xf32>
    %cst_4 = arith.constant 0.000000e+00 : f32
    %8 = vector.broadcast %cst_4 : f32 to vector<2x1x512xf32>
    %c0_5 = arith.constant 0 : index
    %c0_6 = arith.constant 0 : index
    %c0_7 = arith.constant 0 : index
    %9 = vector.load %arg6[%c0_5, %c0_6, %c0_7] : memref<2x1x512xf32, #tpu.memory_space<vmem>>, vector<2x1x512xf32>
    tpu.vector_store %arg6[%c0_5, %c0_6, %c0_7], %8 {strides = array<i32>} : memref<2x1x512xf32, #tpu.memory_space<vmem>>, vector<2x1x512xf32>,
    %c0_8 = arith.constant 0 : index
    %c0_9 = arith.constant 0 : index
    %c128 = arith.constant 128 : index
    %10 = vector.load %arg6[%c0_8, %c0_9, %c128] : memref<2x1x512xf32, #tpu.memory_space<vmem>>, vector<1x1x256xf32>
    %11 = vector.shape_cast %10 : vector<1x1x256xf32> to vector<1x256xf32>
    %12 = vector.shape_cast %3 : vector<1x256xf32> to vector<1x1x256xf32>
    tpu.vector_store %arg6[%c0_8, %c0_9, %c128], %12 {strides = array<i32>} : memref<2x1x512xf32, #tpu.memory_space<vmem>>, vector<1x1x256xf32>,
    %c1 = arith.constant 1 : index
    %c0_10 = arith.constant 0 : index
    %c128_11 = arith.constant 128 : index
    %13 = vector.load %arg6[%c1, %c0_10, %c128_11] : memref<2x1x512xf32, #tpu.memory_space<vmem>>, vector<1x1x256xf32>
    %14 = vector.shape_cast %13 : vector<1x1x256xf32> to vector<1x256xf32>
    %15 = vector.shape_cast %7 : vector<1x256xf32> to vector<1x1x256xf32>
    tpu.vector_store %arg6[%c1, %c0_10, %c128_11], %15 {strides = array<i32>} : memref<2x1x512xf32, #tpu.memory_space<vmem>>, vector<1x1x256xf32>,
    %c0_12 = arith.constant 0 : index
    %c0_13 = arith.constant 0 : index
    %16 = vector.load %arg4[%c0_12, %c0_13] : memref<1x256xi32, #tpu.memory_space<vmem>>, vector<1x256xi32>
    %c0_14 = arith.constant 0 : index
    %17 = memref.load %arg3[%c0_14] : memref<1xf32, #tpu.memory_space<smem>>
    %18 = vector.broadcast %17 : f32 to vector<1x256xf32>
    %cst_15 = arith.constant 0.000000e+00 : f32
    %19 = vector.broadcast %cst_15 : f32 to vector<1x256xf32>
    %c0_16 = arith.constant 0 : index
    %20 = memref.load %arg2[%c0_16] : memref<98xf32, #tpu.memory_space<smem>>
    %c0_17 = arith.constant 0 : index
    %c0_18 = arith.constant 0 : index
    %c77 = arith.constant 77 : index
    %21 = vector.load %arg6[%c0_17, %c0_18, %c77] : memref<2x1x512xf32, #tpu.memory_space<vmem>>, vector<1x1x256xf32>
    %22 = vector.shape_cast %21 : vector<1x1x256xf32> to vector<1x256xf32>
    %23 = vector.broadcast %20 : f32 to vector<1x256xf32>
    %24 = arith.mulf %23, %22 : vector<1x256xf32>
    %25 = arith.addf %19, %24 : vector<1x256xf32>
    %c7 = arith.constant 7 : index
    %26 = memref.load %arg2[%c7] : memref<98xf32, #tpu.memory_space<smem>>
    %c0_19 = arith.constant 0 : index
    %c0_20 = arith.constant 0 : index
    %c93 = arith.constant 93 : index
    %27 = vector.load %arg6[%c0_19, %c0_20, %c93] : memref<2x1x512xf32, #tpu.memory_space<vmem>>, vector<1x1x256xf32>
    %28 = vector.shape_cast %27 : vector<1x1x256xf32> to vector<1x256xf32>
    %29 = vector.broadcast %26 : f32 to vector<1x256xf32>
    %30 = arith.mulf %29, %28 : vector<1x256xf32>
    %31 = arith.addf %25, %30 : vector<1x256xf32>
    %c14 = arith.constant 14 : index
    %32 = memref.load %arg2[%c14] : memref<98xf32, #tpu.memory_space<smem>>
    %c0_21 = arith.constant 0 : index
    %c0_22 = arith.constant 0 : index
    %c109 = arith.constant 109 : index
    %33 = vector.load %arg6[%c0_21, %c0_22, %c109] : memref<2x1x512xf32, #tpu.memory_space<vmem>>, vector<1x1x256xf32>
    %34 = vector.shape_cast %33 : vector<1x1x256xf32> to vector<1x256xf32>
    %35 = vector.broadcast %32 : f32 to vector<1x256xf32>
    %36 = arith.mulf %35, %34 : vector<1x256xf32>
    %37 = arith.addf %31, %36 : vector<1x256xf32>
    %c21 = arith.constant 21 : index
    %38 = memref.load %arg2[%c21] : memref<98xf32, #tpu.memory_space<smem>>
    %c0_23 = arith.constant 0 : index
    %c0_24 = arith.constant 0 : index
    %c125 = arith.constant 125 : index
    %39 = vector.load %arg6[%c0_23, %c0_24, %c125] : memref<2x1x512xf32, #tpu.memory_space<vmem>>, vector<1x1x256xf32>
    %40 = vector.shape_cast %39 : vector<1x1x256xf32> to vector<1x256xf32>
    %41 = vector.broadcast %38 : f32 to vector<1x256xf32>
    %42 = arith.mulf %41, %40 : vector<1x256xf32>
    %43 = arith.addf %37, %42 : vector<1x256xf32>
    %c28 = arith.constant 28 : index
    %44 = memref.load %arg2[%c28] : memref<98xf32, #tpu.memory_space<smem>>
    %c0_25 = arith.constant 0 : index
    %c0_26 = arith.constant 0 : index
    %c141 = arith.constant 141 : index
    %45 = vector.load %arg6[%c0_25, %c0_26, %c141] : memref<2x1x512xf32, #tpu.memory_space<vmem>>, vector<1x1x256xf32>
    %46 = vector.shape_cast %45 : vector<1x1x256xf32> to vector<1x256xf32>
    %47 = vector.broadcast %44 : f32 to vector<1x256xf32>
    %48 = arith.mulf %47, %46 : vector<1x256xf32>
    %49 = arith.addf %43, %48 : vector<1x256xf32>
    %c35 = arith.constant 35 : index
    %50 = memref.load %arg2[%c35] : memref<98xf32, #tpu.memory_space<smem>>
    %c0_27 = arith.constant 0 : index
    %c0_28 = arith.constant 0 : index
    %c157 = arith.constant 157 : index
    %51 = vector.load %arg6[%c0_27, %c0_28, %c157] : memref<2x1x512xf32, #tpu.memory_space<vmem>>, vector<1x1x256xf32>
    %52 = vector.shape_cast %51 : vector<1x1x256xf32> to vector<1x256xf32>
    %53 = vector.broadcast %50 : f32 to vector<1x256xf32>
    %54 = arith.mulf %53, %52 : vector<1x256xf32>
    %55 = arith.addf %49, %54 : vector<1x256xf32>
    %c42 = arith.constant 42 : index
    %56 = memref.load %arg2[%c42] : memref<98xf32, #tpu.memory_space<smem>>
    %c0_29 = arith.constant 0 : index
    %c0_30 = arith.constant 0 : index
    %c173 = arith.constant 173 : index
    %57 = vector.load %arg6[%c0_29, %c0_30, %c173] : memref<2x1x512xf32, #tpu.memory_space<vmem>>, vector<1x1x256xf32>
    %58 = vector.shape_cast %57 : vector<1x1x256xf32> to vector<1x256xf32>
    %59 = vector.broadcast %56 : f32 to vector<1x256xf32>
    %60 = arith.mulf %59, %58 : vector<1x256xf32>
    %61 = arith.addf %55, %60 : vector<1x256xf32>
    %c-3_i32 = arith.constant -3 : i32
    %62 = vector.broadcast %c-3_i32 : i32 to vector<1x256xi32>
    %63 = arith.addi %16, %62 : vector<1x256xi32>
    %c0_i32 = arith.constant 0 : i32
    %64 = vector.broadcast %c0_i32 : i32 to vector<1x256xi32>
    %65 = arith.cmpi sge, %63, %64 : vector<1x256xi32>
    %c-3_i32_31 = arith.constant -3 : i32
    %66 = vector.broadcast %c-3_i32_31 : i32 to vector<1x256xi32>
    %67 = arith.addi %16, %66 : vector<1x256xi32>
    %c16_i32 = arith.constant 16 : i32
    %68 = vector.broadcast %c16_i32 : i32 to vector<1x256xi32>
    %69 = arith.cmpi slt, %67, %68 : vector<1x256xi32>
    %70 = arith.andi %65, %69 : vector<1x256xi1>
    %cst_32 = arith.constant 0.000000e+00 : f32
    %71 = vector.broadcast %cst_32 : f32 to vector<1x256xf32>
    %72 = arith.select %70, %61, %71 : vector<1x256xi1>, vector<1x256xf32>
    %73 = arith.addf %18, %72 : vector<1x256xf32>
    %cst_33 = arith.constant 0.000000e+00 : f32
    %74 = vector.broadcast %cst_33 : f32 to vector<1x256xf32>
    %c1_34 = arith.constant 1 : index
    %75 = memref.load %arg2[%c1_34] : memref<98xf32, #tpu.memory_space<smem>>
    %c0_35 = arith.constant 0 : index
    %c0_36 = arith.constant 0 : index
    %c78 = arith.constant 78 : index
    %76 = vector.load %arg6[%c0_35, %c0_36, %c78] : memref<2x1x512xf32, #tpu.memory_space<vmem>>, vector<1x1x256xf32>
    %77 = vector.shape_cast %76 : vector<1x1x256xf32> to vector<1x256xf32>
    %78 = vector.broadcast %75 : f32 to vector<1x256xf32>
    %79 = arith.mulf %78, %77 : vector<1x256xf32>
    %80 = arith.addf %74, %79 : vector<1x256xf32>
    %c8 = arith.constant 8 : index
    %81 = memref.load %arg2[%c8] : memref<98xf32, #tpu.memory_space<smem>>
    %c0_37 = arith.constant 0 : index
    %c0_38 = arith.constant 0 : index
    %c94 = arith.constant 94 : index
    %82 = vector.load %arg6[%c0_37, %c0_38, %c94] : memref<2x1x512xf32, #tpu.memory_space<vmem>>, vector<1x1x256xf32>
    %83 = vector.shape_cast %82 : vector<1x1x256xf32> to vector<1x256xf32>
    %84 = vector.broadcast %81 : f32 to vector<1x256xf32>
    %85 = arith.mulf %84, %83 : vector<1x256xf32>
    %86 = arith.addf %80, %85 : vector<1x256xf32>
    %c15 = arith.constant 15 : index
    %87 = memref.load %arg2[%c15] : memref<98xf32, #tpu.memory_space<smem>>
    %c0_39 = arith.constant 0 : index
    %c0_40 = arith.constant 0 : index
    %c110 = arith.constant 110 : index
    %88 = vector.load %arg6[%c0_39, %c0_40, %c110] : memref<2x1x512xf32, #tpu.memory_space<vmem>>, vector<1x1x256xf32>
    %89 = vector.shape_cast %88 : vector<1x1x256xf32> to vector<1x256xf32>
    %90 = vector.broadcast %87 : f32 to vector<1x256xf32>
    %91 = arith.mulf %90, %89 : vector<1x256xf32>
    %92 = arith.addf %86, %91 : vector<1x256xf32>
    %c22 = arith.constant 22 : index
    %93 = memref.load %arg2[%c22] : memref<98xf32, #tpu.memory_space<smem>>
    %c0_41 = arith.constant 0 : index
    %c0_42 = arith.constant 0 : index
    %c126 = arith.constant 126 : index
    %94 = vector.load %arg6[%c0_41, %c0_42, %c126] : memref<2x1x512xf32, #tpu.memory_space<vmem>>, vector<1x1x256xf32>
    %95 = vector.shape_cast %94 : vector<1x1x256xf32> to vector<1x256xf32>
    %96 = vector.broadcast %93 : f32 to vector<1x256xf32>
    %97 = arith.mulf %96, %95 : vector<1x256xf32>
    %98 = arith.addf %92, %97 : vector<1x256xf32>
    %c29 = arith.constant 29 : index
    %99 = memref.load %arg2[%c29] : memref<98xf32, #tpu.memory_space<smem>>
    %c0_43 = arith.constant 0 : index
    %c0_44 = arith.constant 0 : index
    %c142 = arith.constant 142 : index
    %100 = vector.load %arg6[%c0_43, %c0_44, %c142] : memref<2x1x512xf32, #tpu.memory_space<vmem>>, vector<1x1x256xf32>
    %101 = vector.shape_cast %100 : vector<1x1x256xf32> to vector<1x256xf32>
    %102 = vector.broadcast %99 : f32 to vector<1x256xf32>
    %103 = arith.mulf %102, %101 : vector<1x256xf32>
    %104 = arith.addf %98, %103 : vector<1x256xf32>
    %c36 = arith.constant 36 : index
    %105 = memref.load %arg2[%c36] : memref<98xf32, #tpu.memory_space<smem>>
    %c0_45 = arith.constant 0 : index
    %c0_46 = arith.constant 0 : index
    %c158 = arith.constant 158 : index
    %106 = vector.load %arg6[%c0_45, %c0_46, %c158] : memref<2x1x512xf32, #tpu.memory_space<vmem>>, vector<1x1x256xf32>
    %107 = vector.shape_cast %106 : vector<1x1x256xf32> to vector<1x256xf32>
    %108 = vector.broadcast %105 : f32 to vector<1x256xf32>
    %109 = arith.mulf %108, %107 : vector<1x256xf32>
    %110 = arith.addf %104, %109 : vector<1x256xf32>
    %c43 = arith.constant 43 : index
    %111 = memref.load %arg2[%c43] : memref<98xf32, #tpu.memory_space<smem>>
    %c0_47 = arith.constant 0 : index
    %c0_48 = arith.constant 0 : index
    %c174 = arith.constant 174 : index
    %112 = vector.load %arg6[%c0_47, %c0_48, %c174] : memref<2x1x512xf32, #tpu.memory_space<vmem>>, vector<1x1x256xf32>
    %113 = vector.shape_cast %112 : vector<1x1x256xf32> to vector<1x256xf32>
    %114 = vector.broadcast %111 : f32 to vector<1x256xf32>
    %115 = arith.mulf %114, %113 : vector<1x256xf32>
    %116 = arith.addf %110, %115 : vector<1x256xf32>
    %c-2_i32 = arith.constant -2 : i32
    %117 = vector.broadcast %c-2_i32 : i32 to vector<1x256xi32>
    %118 = arith.addi %16, %117 : vector<1x256xi32>
    %c0_i32_49 = arith.constant 0 : i32
    %119 = vector.broadcast %c0_i32_49 : i32 to vector<1x256xi32>
    %120 = arith.cmpi sge, %118, %119 : vector<1x256xi32>
    %c-2_i32_50 = arith.constant -2 : i32
    %121 = vector.broadcast %c-2_i32_50 : i32 to vector<1x256xi32>
    %122 = arith.addi %16, %121 : vector<1x256xi32>
    %c16_i32_51 = arith.constant 16 : i32
    %123 = vector.broadcast %c16_i32_51 : i32 to vector<1x256xi32>
    %124 = arith.cmpi slt, %122, %123 : vector<1x256xi32>
    %125 = arith.andi %120, %124 : vector<1x256xi1>
    %cst_52 = arith.constant 0.000000e+00 : f32
    %126 = vector.broadcast %cst_52 : f32 to vector<1x256xf32>
    %127 = arith.select %125, %116, %126 : vector<1x256xi1>, vector<1x256xf32>
    %128 = arith.addf %73, %127 : vector<1x256xf32>
    %cst_53 = arith.constant 0.000000e+00 : f32
    %129 = vector.broadcast %cst_53 : f32 to vector<1x256xf32>
    %c2 = arith.constant 2 : index
    %130 = memref.load %arg2[%c2] : memref<98xf32, #tpu.memory_space<smem>>
    %c0_54 = arith.constant 0 : index
    %c0_55 = arith.constant 0 : index
    %c79 = arith.constant 79 : index
    %131 = vector.load %arg6[%c0_54, %c0_55, %c79] : memref<2x1x512xf32, #tpu.memory_space<vmem>>, vector<1x1x256xf32>
    %132 = vector.shape_cast %131 : vector<1x1x256xf32> to vector<1x256xf32>
    %133 = vector.broadcast %130 : f32 to vector<1x256xf32>
    %134 = arith.mulf %133, %132 : vector<1x256xf32>
    %135 = arith.addf %129, %134 : vector<1x256xf32>
    %c9 = arith.constant 9 : index
    %136 = memref.load %arg2[%c9] : memref<98xf32, #tpu.memory_space<smem>>
    %c0_56 = arith.constant 0 : index
    %c0_57 = arith.constant 0 : index
    %c95 = arith.constant 95 : index
    %137 = vector.load %arg6[%c0_56, %c0_57, %c95] : memref<2x1x512xf32, #tpu.memory_space<vmem>>, vector<1x1x256xf32>
    %138 = vector.shape_cast %137 : vector<1x1x256xf32> to vector<1x256xf32>
    %139 = vector.broadcast %136 : f32 to vector<1x256xf32>
    %140 = arith.mulf %139, %138 : vector<1x256xf32>
    %141 = arith.addf %135, %140 : vector<1x256xf32>
    %c16 = arith.constant 16 : index
    %142 = memref.load %arg2[%c16] : memref<98xf32, #tpu.memory_space<smem>>
    %c0_58 = arith.constant 0 : index
    %c0_59 = arith.constant 0 : index
    %c111 = arith.constant 111 : index
    %143 = vector.load %arg6[%c0_58, %c0_59, %c111] : memref<2x1x512xf32, #tpu.memory_space<vmem>>, vector<1x1x256xf32>
    %144 = vector.shape_cast %143 : vector<1x1x256xf32> to vector<1x256xf32>
    %145 = vector.broadcast %142 : f32 to vector<1x256xf32>
    %146 = arith.mulf %145, %144 : vector<1x256xf32>
    %147 = arith.addf %141, %146 : vector<1x256xf32>
    %c23 = arith.constant 23 : index
    %148 = memref.load %arg2[%c23] : memref<98xf32, #tpu.memory_space<smem>>
    %c0_60 = arith.constant 0 : index
    %c0_61 = arith.constant 0 : index
    %c127 = arith.constant 127 : index
    %149 = vector.load %arg6[%c0_60, %c0_61, %c127] : memref<2x1x512xf32, #tpu.memory_space<vmem>>, vector<1x1x256xf32>
    %150 = vector.shape_cast %149 : vector<1x1x256xf32> to vector<1x256xf32>
    %151 = vector.broadcast %148 : f32 to vector<1x256xf32>
    %152 = arith.mulf %151, %150 : vector<1x256xf32>
    %153 = arith.addf %147, %152 : vector<1x256xf32>
    %c30 = arith.constant 30 : index
    %154 = memref.load %arg2[%c30] : memref<98xf32, #tpu.memory_space<smem>>
    %c0_62 = arith.constant 0 : index
    %c0_63 = arith.constant 0 : index
    %c143 = arith.constant 143 : index
    %155 = vector.load %arg6[%c0_62, %c0_63, %c143] : memref<2x1x512xf32, #tpu.memory_space<vmem>>, vector<1x1x256xf32>
    %156 = vector.shape_cast %155 : vector<1x1x256xf32> to vector<1x256xf32>
    %157 = vector.broadcast %154 : f32 to vector<1x256xf32>
    %158 = arith.mulf %157, %156 : vector<1x256xf32>
    %159 = arith.addf %153, %158 : vector<1x256xf32>
    %c37 = arith.constant 37 : index
    %160 = memref.load %arg2[%c37] : memref<98xf32, #tpu.memory_space<smem>>
    %c0_64 = arith.constant 0 : index
    %c0_65 = arith.constant 0 : index
    %c159 = arith.constant 159 : index
    %161 = vector.load %arg6[%c0_64, %c0_65, %c159] : memref<2x1x512xf32, #tpu.memory_space<vmem>>, vector<1x1x256xf32>
    %162 = vector.shape_cast %161 : vector<1x1x256xf32> to vector<1x256xf32>
    %163 = vector.broadcast %160 : f32 to vector<1x256xf32>
    %164 = arith.mulf %163, %162 : vector<1x256xf32>
    %165 = arith.addf %159, %164 : vector<1x256xf32>
    %c44 = arith.constant 44 : index
    %166 = memref.load %arg2[%c44] : memref<98xf32, #tpu.memory_space<smem>>
    %c0_66 = arith.constant 0 : index
    %c0_67 = arith.constant 0 : index
    %c175 = arith.constant 175 : index
    %167 = vector.load %arg6[%c0_66, %c0_67, %c175] : memref<2x1x512xf32, #tpu.memory_space<vmem>>, vector<1x1x256xf32>
    %168 = vector.shape_cast %167 : vector<1x1x256xf32> to vector<1x256xf32>
    %169 = vector.broadcast %166 : f32 to vector<1x256xf32>
    %170 = arith.mulf %169, %168 : vector<1x256xf32>
    %171 = arith.addf %165, %170 : vector<1x256xf32>
    %c-1_i32 = arith.constant -1 : i32
    %172 = vector.broadcast %c-1_i32 : i32 to vector<1x256xi32>
    %173 = arith.addi %16, %172 : vector<1x256xi32>
    %c0_i32_68 = arith.constant 0 : i32
    %174 = vector.broadcast %c0_i32_68 : i32 to vector<1x256xi32>
    %175 = arith.cmpi sge, %173, %174 : vector<1x256xi32>
    %c-1_i32_69 = arith.constant -1 : i32
    %176 = vector.broadcast %c-1_i32_69 : i32 to vector<1x256xi32>
    %177 = arith.addi %16, %176 : vector<1x256xi32>
    %c16_i32_70 = arith.constant 16 : i32
    %178 = vector.broadcast %c16_i32_70 : i32 to vector<1x256xi32>
    %179 = arith.cmpi slt, %177, %178 : vector<1x256xi32>
    %180 = arith.andi %175, %179 : vector<1x256xi1>
    %cst_71 = arith.constant 0.000000e+00 : f32
    %181 = vector.broadcast %cst_71 : f32 to vector<1x256xf32>
    %182 = arith.select %180, %171, %181 : vector<1x256xi1>, vector<1x256xf32>
    %183 = arith.addf %128, %182 : vector<1x256xf32>
    %cst_72 = arith.constant 0.000000e+00 : f32
    %184 = vector.broadcast %cst_72 : f32 to vector<1x256xf32>
    %c3 = arith.constant 3 : index
    %185 = memref.load %arg2[%c3] : memref<98xf32, #tpu.memory_space<smem>>
    %c0_73 = arith.constant 0 : index
    %c0_74 = arith.constant 0 : index
    %c80 = arith.constant 80 : index
    %186 = vector.load %arg6[%c0_73, %c0_74, %c80] : memref<2x1x512xf32, #tpu.memory_space<vmem>>, vector<1x1x256xf32>
    %187 = vector.shape_cast %186 : vector<1x1x256xf32> to vector<1x256xf32>
    %188 = vector.broadcast %185 : f32 to vector<1x256xf32>
    %189 = arith.mulf %188, %187 : vector<1x256xf32>
    %190 = arith.addf %184, %189 : vector<1x256xf32>
    %c10 = arith.constant 10 : index
    %191 = memref.load %arg2[%c10] : memref<98xf32, #tpu.memory_space<smem>>
    %c0_75 = arith.constant 0 : index
    %c0_76 = arith.constant 0 : index
    %c96 = arith.constant 96 : index
    %192 = vector.load %arg6[%c0_75, %c0_76, %c96] : memref<2x1x512xf32, #tpu.memory_space<vmem>>, vector<1x1x256xf32>
    %193 = vector.shape_cast %192 : vector<1x1x256xf32> to vector<1x256xf32>
    %194 = vector.broadcast %191 : f32 to vector<1x256xf32>
    %195 = arith.mulf %194, %193 : vector<1x256xf32>
    %196 = arith.addf %190, %195 : vector<1x256xf32>
    %c17 = arith.constant 17 : index
    %197 = memref.load %arg2[%c17] : memref<98xf32, #tpu.memory_space<smem>>
    %c0_77 = arith.constant 0 : index
    %c0_78 = arith.constant 0 : index
    %c112 = arith.constant 112 : index
    %198 = vector.load %arg6[%c0_77, %c0_78, %c112] : memref<2x1x512xf32, #tpu.memory_space<vmem>>, vector<1x1x256xf32>
    %199 = vector.shape_cast %198 : vector<1x1x256xf32> to vector<1x256xf32>
    %200 = vector.broadcast %197 : f32 to vector<1x256xf32>
    %201 = arith.mulf %200, %199 : vector<1x256xf32>
    %202 = arith.addf %196, %201 : vector<1x256xf32>
    %c24 = arith.constant 24 : index
    %203 = memref.load %arg2[%c24] : memref<98xf32, #tpu.memory_space<smem>>
    %c0_79 = arith.constant 0 : index
    %c0_80 = arith.constant 0 : index
    %c128_81 = arith.constant 128 : index
    %204 = vector.load %arg6[%c0_79, %c0_80, %c128_81] : memref<2x1x512xf32, #tpu.memory_space<vmem>>, vector<1x1x256xf32>
    %205 = vector.shape_cast %204 : vector<1x1x256xf32> to vector<1x256xf32>
    %206 = vector.broadcast %203 : f32 to vector<1x256xf32>
    %207 = arith.mulf %206, %205 : vector<1x256xf32>
    %208 = arith.addf %202, %207 : vector<1x256xf32>
    %c31 = arith.constant 31 : index
    %209 = memref.load %arg2[%c31] : memref<98xf32, #tpu.memory_space<smem>>
    %c0_82 = arith.constant 0 : index
    %c0_83 = arith.constant 0 : index
    %c144 = arith.constant 144 : index
    %210 = vector.load %arg6[%c0_82, %c0_83, %c144] : memref<2x1x512xf32, #tpu.memory_space<vmem>>, vector<1x1x256xf32>
    %211 = vector.shape_cast %210 : vector<1x1x256xf32> to vector<1x256xf32>
    %212 = vector.broadcast %209 : f32 to vector<1x256xf32>
    %213 = arith.mulf %212, %211 : vector<1x256xf32>
    %214 = arith.addf %208, %213 : vector<1x256xf32>
    %c38 = arith.constant 38 : index
    %215 = memref.load %arg2[%c38] : memref<98xf32, #tpu.memory_space<smem>>
    %c0_84 = arith.constant 0 : index
    %c0_85 = arith.constant 0 : index
    %c160 = arith.constant 160 : index
    %216 = vector.load %arg6[%c0_84, %c0_85, %c160] : memref<2x1x512xf32, #tpu.memory_space<vmem>>, vector<1x1x256xf32>
    %217 = vector.shape_cast %216 : vector<1x1x256xf32> to vector<1x256xf32>
    %218 = vector.broadcast %215 : f32 to vector<1x256xf32>
    %219 = arith.mulf %218, %217 : vector<1x256xf32>
    %220 = arith.addf %214, %219 : vector<1x256xf32>
    %c45 = arith.constant 45 : index
    %221 = memref.load %arg2[%c45] : memref<98xf32, #tpu.memory_space<smem>>
    %c0_86 = arith.constant 0 : index
    %c0_87 = arith.constant 0 : index
    %c176 = arith.constant 176 : index
    %222 = vector.load %arg6[%c0_86, %c0_87, %c176] : memref<2x1x512xf32, #tpu.memory_space<vmem>>, vector<1x1x256xf32>
    %223 = vector.shape_cast %222 : vector<1x1x256xf32> to vector<1x256xf32>
    %224 = vector.broadcast %221 : f32 to vector<1x256xf32>
    %225 = arith.mulf %224, %223 : vector<1x256xf32>
    %226 = arith.addf %220, %225 : vector<1x256xf32>
    %227 = arith.addf %183, %226 : vector<1x256xf32>
    %cst_88 = arith.constant 0.000000e+00 : f32
    %228 = vector.broadcast %cst_88 : f32 to vector<1x256xf32>
    %c4 = arith.constant 4 : index
    %229 = memref.load %arg2[%c4] : memref<98xf32, #tpu.memory_space<smem>>
    %c0_89 = arith.constant 0 : index
    %c0_90 = arith.constant 0 : index
    %c81 = arith.constant 81 : index
    %230 = vector.load %arg6[%c0_89, %c0_90, %c81] : memref<2x1x512xf32, #tpu.memory_space<vmem>>, vector<1x1x256xf32>
    %231 = vector.shape_cast %230 : vector<1x1x256xf32> to vector<1x256xf32>
    %232 = vector.broadcast %229 : f32 to vector<1x256xf32>
    %233 = arith.mulf %232, %231 : vector<1x256xf32>
    %234 = arith.addf %228, %233 : vector<1x256xf32>
    %c11 = arith.constant 11 : index
    %235 = memref.load %arg2[%c11] : memref<98xf32, #tpu.memory_space<smem>>
    %c0_91 = arith.constant 0 : index
    %c0_92 = arith.constant 0 : index
    %c97 = arith.constant 97 : index
    %236 = vector.load %arg6[%c0_91, %c0_92, %c97] : memref<2x1x512xf32, #tpu.memory_space<vmem>>, vector<1x1x256xf32>
    %237 = vector.shape_cast %236 : vector<1x1x256xf32> to vector<1x256xf32>
    %238 = vector.broadcast %235 : f32 to vector<1x256xf32>
    %239 = arith.mulf %238, %237 : vector<1x256xf32>
    %240 = arith.addf %234, %239 : vector<1x256xf32>
    %c18 = arith.constant 18 : index
    %241 = memref.load %arg2[%c18] : memref<98xf32, #tpu.memory_space<smem>>
    %c0_93 = arith.constant 0 : index
    %c0_94 = arith.constant 0 : index
    %c113 = arith.constant 113 : index
    %242 = vector.load %arg6[%c0_93, %c0_94, %c113] : memref<2x1x512xf32, #tpu.memory_space<vmem>>, vector<1x1x256xf32>
    %243 = vector.shape_cast %242 : vector<1x1x256xf32> to vector<1x256xf32>
    %244 = vector.broadcast %241 : f32 to vector<1x256xf32>
    %245 = arith.mulf %244, %243 : vector<1x256xf32>
    %246 = arith.addf %240, %245 : vector<1x256xf32>
    %c25 = arith.constant 25 : index
    %247 = memref.load %arg2[%c25] : memref<98xf32, #tpu.memory_space<smem>>
    %c0_95 = arith.constant 0 : index
    %c0_96 = arith.constant 0 : index
    %c129 = arith.constant 129 : index
    %248 = vector.load %arg6[%c0_95, %c0_96, %c129] : memref<2x1x512xf32, #tpu.memory_space<vmem>>, vector<1x1x256xf32>
    %249 = vector.shape_cast %248 : vector<1x1x256xf32> to vector<1x256xf32>
    %250 = vector.broadcast %247 : f32 to vector<1x256xf32>
    %251 = arith.mulf %250, %249 : vector<1x256xf32>
    %252 = arith.addf %246, %251 : vector<1x256xf32>
    %c32 = arith.constant 32 : index
    %253 = memref.load %arg2[%c32] : memref<98xf32, #tpu.memory_space<smem>>
    %c0_97 = arith.constant 0 : index
    %c0_98 = arith.constant 0 : index
    %c145 = arith.constant 145 : index
    %254 = vector.load %arg6[%c0_97, %c0_98, %c145] : memref<2x1x512xf32, #tpu.memory_space<vmem>>, vector<1x1x256xf32>
    %255 = vector.shape_cast %254 : vector<1x1x256xf32> to vector<1x256xf32>
    %256 = vector.broadcast %253 : f32 to vector<1x256xf32>
    %257 = arith.mulf %256, %255 : vector<1x256xf32>
    %258 = arith.addf %252, %257 : vector<1x256xf32>
    %c39 = arith.constant 39 : index
    %259 = memref.load %arg2[%c39] : memref<98xf32, #tpu.memory_space<smem>>
    %c0_99 = arith.constant 0 : index
    %c0_100 = arith.constant 0 : index
    %c161 = arith.constant 161 : index
    %260 = vector.load %arg6[%c0_99, %c0_100, %c161] : memref<2x1x512xf32, #tpu.memory_space<vmem>>, vector<1x1x256xf32>
    %261 = vector.shape_cast %260 : vector<1x1x256xf32> to vector<1x256xf32>
    %262 = vector.broadcast %259 : f32 to vector<1x256xf32>
    %263 = arith.mulf %262, %261 : vector<1x256xf32>
    %264 = arith.addf %258, %263 : vector<1x256xf32>
    %c46 = arith.constant 46 : index
    %265 = memref.load %arg2[%c46] : memref<98xf32, #tpu.memory_space<smem>>
    %c0_101 = arith.constant 0 : index
    %c0_102 = arith.constant 0 : index
    %c177 = arith.constant 177 : index
    %266 = vector.load %arg6[%c0_101, %c0_102, %c177] : memref<2x1x512xf32, #tpu.memory_space<vmem>>, vector<1x1x256xf32>
    %267 = vector.shape_cast %266 : vector<1x1x256xf32> to vector<1x256xf32>
    %268 = vector.broadcast %265 : f32 to vector<1x256xf32>
    %269 = arith.mulf %268, %267 : vector<1x256xf32>
    %270 = arith.addf %264, %269 : vector<1x256xf32>
    %c1_i32 = arith.constant 1 : i32
    %271 = vector.broadcast %c1_i32 : i32 to vector<1x256xi32>
    %272 = arith.addi %16, %271 : vector<1x256xi32>
    %c0_i32_103 = arith.constant 0 : i32
    %273 = vector.broadcast %c0_i32_103 : i32 to vector<1x256xi32>
    %274 = arith.cmpi sge, %272, %273 : vector<1x256xi32>
    %c1_i32_104 = arith.constant 1 : i32
    %275 = vector.broadcast %c1_i32_104 : i32 to vector<1x256xi32>
    %276 = arith.addi %16, %275 : vector<1x256xi32>
    %c16_i32_105 = arith.constant 16 : i32
    %277 = vector.broadcast %c16_i32_105 : i32 to vector<1x256xi32>
    %278 = arith.cmpi slt, %276, %277 : vector<1x256xi32>
    %279 = arith.andi %274, %278 : vector<1x256xi1>
    %cst_106 = arith.constant 0.000000e+00 : f32
    %280 = vector.broadcast %cst_106 : f32 to vector<1x256xf32>
    %281 = arith.select %279, %270, %280 : vector<1x256xi1>, vector<1x256xf32>
    %282 = arith.addf %227, %281 : vector<1x256xf32>
    %cst_107 = arith.constant 0.000000e+00 : f32
    %283 = vector.broadcast %cst_107 : f32 to vector<1x256xf32>
    %c5 = arith.constant 5 : index
    %284 = memref.load %arg2[%c5] : memref<98xf32, #tpu.memory_space<smem>>
    %c0_108 = arith.constant 0 : index
    %c0_109 = arith.constant 0 : index
    %c82 = arith.constant 82 : index
    %285 = vector.load %arg6[%c0_108, %c0_109, %c82] : memref<2x1x512xf32, #tpu.memory_space<vmem>>, vector<1x1x256xf32>
    %286 = vector.shape_cast %285 : vector<1x1x256xf32> to vector<1x256xf32>
    %287 = vector.broadcast %284 : f32 to vector<1x256xf32>
    %288 = arith.mulf %287, %286 : vector<1x256xf32>
    %289 = arith.addf %283, %288 : vector<1x256xf32>
    %c12 = arith.constant 12 : index
    %290 = memref.load %arg2[%c12] : memref<98xf32, #tpu.memory_space<smem>>
    %c0_110 = arith.constant 0 : index
    %c0_111 = arith.constant 0 : index
    %c98 = arith.constant 98 : index
    %291 = vector.load %arg6[%c0_110, %c0_111, %c98] : memref<2x1x512xf32, #tpu.memory_space<vmem>>, vector<1x1x256xf32>
    %292 = vector.shape_cast %291 : vector<1x1x256xf32> to vector<1x256xf32>
    %293 = vector.broadcast %290 : f32 to vector<1x256xf32>
    %294 = arith.mulf %293, %292 : vector<1x256xf32>
    %295 = arith.addf %289, %294 : vector<1x256xf32>
    %c19 = arith.constant 19 : index
    %296 = memref.load %arg2[%c19] : memref<98xf32, #tpu.memory_space<smem>>
    %c0_112 = arith.constant 0 : index
    %c0_113 = arith.constant 0 : index
    %c114 = arith.constant 114 : index
    %297 = vector.load %arg6[%c0_112, %c0_113, %c114] : memref<2x1x512xf32, #tpu.memory_space<vmem>>, vector<1x1x256xf32>
    %298 = vector.shape_cast %297 : vector<1x1x256xf32> to vector<1x256xf32>
    %299 = vector.broadcast %296 : f32 to vector<1x256xf32>
    %300 = arith.mulf %299, %298 : vector<1x256xf32>
    %301 = arith.addf %295, %300 : vector<1x256xf32>
    %c26 = arith.constant 26 : index
    %302 = memref.load %arg2[%c26] : memref<98xf32, #tpu.memory_space<smem>>
    %c0_114 = arith.constant 0 : index
    %c0_115 = arith.constant 0 : index
    %c130 = arith.constant 130 : index
    %303 = vector.load %arg6[%c0_114, %c0_115, %c130] : memref<2x1x512xf32, #tpu.memory_space<vmem>>, vector<1x1x256xf32>
    %304 = vector.shape_cast %303 : vector<1x1x256xf32> to vector<1x256xf32>
    %305 = vector.broadcast %302 : f32 to vector<1x256xf32>
    %306 = arith.mulf %305, %304 : vector<1x256xf32>
    %307 = arith.addf %301, %306 : vector<1x256xf32>
    %c33 = arith.constant 33 : index
    %308 = memref.load %arg2[%c33] : memref<98xf32, #tpu.memory_space<smem>>
    %c0_116 = arith.constant 0 : index
    %c0_117 = arith.constant 0 : index
    %c146 = arith.constant 146 : index
    %309 = vector.load %arg6[%c0_116, %c0_117, %c146] : memref<2x1x512xf32, #tpu.memory_space<vmem>>, vector<1x1x256xf32>
    %310 = vector.shape_cast %309 : vector<1x1x256xf32> to vector<1x256xf32>
    %311 = vector.broadcast %308 : f32 to vector<1x256xf32>
    %312 = arith.mulf %311, %310 : vector<1x256xf32>
    %313 = arith.addf %307, %312 : vector<1x256xf32>
    %c40 = arith.constant 40 : index
    %314 = memref.load %arg2[%c40] : memref<98xf32, #tpu.memory_space<smem>>
    %c0_118 = arith.constant 0 : index
    %c0_119 = arith.constant 0 : index
    %c162 = arith.constant 162 : index
    %315 = vector.load %arg6[%c0_118, %c0_119, %c162] : memref<2x1x512xf32, #tpu.memory_space<vmem>>, vector<1x1x256xf32>
    %316 = vector.shape_cast %315 : vector<1x1x256xf32> to vector<1x256xf32>
    %317 = vector.broadcast %314 : f32 to vector<1x256xf32>
    %318 = arith.mulf %317, %316 : vector<1x256xf32>
    %319 = arith.addf %313, %318 : vector<1x256xf32>
    %c47 = arith.constant 47 : index
    %320 = memref.load %arg2[%c47] : memref<98xf32, #tpu.memory_space<smem>>
    %c0_120 = arith.constant 0 : index
    %c0_121 = arith.constant 0 : index
    %c178 = arith.constant 178 : index
    %321 = vector.load %arg6[%c0_120, %c0_121, %c178] : memref<2x1x512xf32, #tpu.memory_space<vmem>>, vector<1x1x256xf32>
    %322 = vector.shape_cast %321 : vector<1x1x256xf32> to vector<1x256xf32>
    %323 = vector.broadcast %320 : f32 to vector<1x256xf32>
    %324 = arith.mulf %323, %322 : vector<1x256xf32>
    %325 = arith.addf %319, %324 : vector<1x256xf32>
    %c2_i32 = arith.constant 2 : i32
    %326 = vector.broadcast %c2_i32 : i32 to vector<1x256xi32>
    %327 = arith.addi %16, %326 : vector<1x256xi32>
    %c0_i32_122 = arith.constant 0 : i32
    %328 = vector.broadcast %c0_i32_122 : i32 to vector<1x256xi32>
    %329 = arith.cmpi sge, %327, %328 : vector<1x256xi32>
    %c2_i32_123 = arith.constant 2 : i32
    %330 = vector.broadcast %c2_i32_123 : i32 to vector<1x256xi32>
    %331 = arith.addi %16, %330 : vector<1x256xi32>
    %c16_i32_124 = arith.constant 16 : i32
    %332 = vector.broadcast %c16_i32_124 : i32 to vector<1x256xi32>
    %333 = arith.cmpi slt, %331, %332 : vector<1x256xi32>
    %334 = arith.andi %329, %333 : vector<1x256xi1>
    %cst_125 = arith.constant 0.000000e+00 : f32
    %335 = vector.broadcast %cst_125 : f32 to vector<1x256xf32>
    %336 = arith.select %334, %325, %335 : vector<1x256xi1>, vector<1x256xf32>
    %337 = arith.addf %282, %336 : vector<1x256xf32>
    %cst_126 = arith.constant 0.000000e+00 : f32
    %338 = vector.broadcast %cst_126 : f32 to vector<1x256xf32>
    %c6 = arith.constant 6 : index
    %339 = memref.load %arg2[%c6] : memref<98xf32, #tpu.memory_space<smem>>
    %c0_127 = arith.constant 0 : index
    %c0_128 = arith.constant 0 : index
    %c83 = arith.constant 83 : index
    %340 = vector.load %arg6[%c0_127, %c0_128, %c83] : memref<2x1x512xf32, #tpu.memory_space<vmem>>, vector<1x1x256xf32>
    %341 = vector.shape_cast %340 : vector<1x1x256xf32> to vector<1x256xf32>
    %342 = vector.broadcast %339 : f32 to vector<1x256xf32>
    %343 = arith.mulf %342, %341 : vector<1x256xf32>
    %344 = arith.addf %338, %343 : vector<1x256xf32>
    %c13 = arith.constant 13 : index
    %345 = memref.load %arg2[%c13] : memref<98xf32, #tpu.memory_space<smem>>
    %c0_129 = arith.constant 0 : index
    %c0_130 = arith.constant 0 : index
    %c99 = arith.constant 99 : index
    %346 = vector.load %arg6[%c0_129, %c0_130, %c99] : memref<2x1x512xf32, #tpu.memory_space<vmem>>, vector<1x1x256xf32>
    %347 = vector.shape_cast %346 : vector<1x1x256xf32> to vector<1x256xf32>
    %348 = vector.broadcast %345 : f32 to vector<1x256xf32>
    %349 = arith.mulf %348, %347 : vector<1x256xf32>
    %350 = arith.addf %344, %349 : vector<1x256xf32>
    %c20 = arith.constant 20 : index
    %351 = memref.load %arg2[%c20] : memref<98xf32, #tpu.memory_space<smem>>
    %c0_131 = arith.constant 0 : index
    %c0_132 = arith.constant 0 : index
    %c115 = arith.constant 115 : index
    %352 = vector.load %arg6[%c0_131, %c0_132, %c115] : memref<2x1x512xf32, #tpu.memory_space<vmem>>, vector<1x1x256xf32>
    %353 = vector.shape_cast %352 : vector<1x1x256xf32> to vector<1x256xf32>
    %354 = vector.broadcast %351 : f32 to vector<1x256xf32>
    %355 = arith.mulf %354, %353 : vector<1x256xf32>
    %356 = arith.addf %350, %355 : vector<1x256xf32>
    %c27 = arith.constant 27 : index
    %357 = memref.load %arg2[%c27] : memref<98xf32, #tpu.memory_space<smem>>
    %c0_133 = arith.constant 0 : index
    %c0_134 = arith.constant 0 : index
    %c131 = arith.constant 131 : index
    %358 = vector.load %arg6[%c0_133, %c0_134, %c131] : memref<2x1x512xf32, #tpu.memory_space<vmem>>, vector<1x1x256xf32>
    %359 = vector.shape_cast %358 : vector<1x1x256xf32> to vector<1x256xf32>
    %360 = vector.broadcast %357 : f32 to vector<1x256xf32>
    %361 = arith.mulf %360, %359 : vector<1x256xf32>
    %362 = arith.addf %356, %361 : vector<1x256xf32>
    %c34 = arith.constant 34 : index
    %363 = memref.load %arg2[%c34] : memref<98xf32, #tpu.memory_space<smem>>
    %c0_135 = arith.constant 0 : index
    %c0_136 = arith.constant 0 : index
    %c147 = arith.constant 147 : index
    %364 = vector.load %arg6[%c0_135, %c0_136, %c147] : memref<2x1x512xf32, #tpu.memory_space<vmem>>, vector<1x1x256xf32>
    %365 = vector.shape_cast %364 : vector<1x1x256xf32> to vector<1x256xf32>
    %366 = vector.broadcast %363 : f32 to vector<1x256xf32>
    %367 = arith.mulf %366, %365 : vector<1x256xf32>
    %368 = arith.addf %362, %367 : vector<1x256xf32>
    %c41 = arith.constant 41 : index
    %369 = memref.load %arg2[%c41] : memref<98xf32, #tpu.memory_space<smem>>
    %c0_137 = arith.constant 0 : index
    %c0_138 = arith.constant 0 : index
    %c163 = arith.constant 163 : index
    %370 = vector.load %arg6[%c0_137, %c0_138, %c163] : memref<2x1x512xf32, #tpu.memory_space<vmem>>, vector<1x1x256xf32>
    %371 = vector.shape_cast %370 : vector<1x1x256xf32> to vector<1x256xf32>
    %372 = vector.broadcast %369 : f32 to vector<1x256xf32>
    %373 = arith.mulf %372, %371 : vector<1x256xf32>
    %374 = arith.addf %368, %373 : vector<1x256xf32>
    %c48 = arith.constant 48 : index
    %375 = memref.load %arg2[%c48] : memref<98xf32, #tpu.memory_space<smem>>
    %c0_139 = arith.constant 0 : index
    %c0_140 = arith.constant 0 : index
    %c179 = arith.constant 179 : index
    %376 = vector.load %arg6[%c0_139, %c0_140, %c179] : memref<2x1x512xf32, #tpu.memory_space<vmem>>, vector<1x1x256xf32>
    %377 = vector.shape_cast %376 : vector<1x1x256xf32> to vector<1x256xf32>
    %378 = vector.broadcast %375 : f32 to vector<1x256xf32>
    %379 = arith.mulf %378, %377 : vector<1x256xf32>
    %380 = arith.addf %374, %379 : vector<1x256xf32>
    %c3_i32 = arith.constant 3 : i32
    %381 = vector.broadcast %c3_i32 : i32 to vector<1x256xi32>
    %382 = arith.addi %16, %381 : vector<1x256xi32>
    %c0_i32_141 = arith.constant 0 : i32
    %383 = vector.broadcast %c0_i32_141 : i32 to vector<1x256xi32>
    %384 = arith.cmpi sge, %382, %383 : vector<1x256xi32>
    %c3_i32_142 = arith.constant 3 : i32
    %385 = vector.broadcast %c3_i32_142 : i32 to vector<1x256xi32>
    %386 = arith.addi %16, %385 : vector<1x256xi32>
    %c16_i32_143 = arith.constant 16 : i32
    %387 = vector.broadcast %c16_i32_143 : i32 to vector<1x256xi32>
    %388 = arith.cmpi slt, %386, %387 : vector<1x256xi32>
    %389 = arith.andi %384, %388 : vector<1x256xi1>
    %cst_144 = arith.constant 0.000000e+00 : f32
    %390 = vector.broadcast %cst_144 : f32 to vector<1x256xf32>
    %391 = arith.select %389, %380, %390 : vector<1x256xi1>, vector<1x256xf32>
    %392 = arith.addf %337, %391 : vector<1x256xf32>
    %cst_145 = arith.constant 0.000000e+00 : f32
    %393 = vector.broadcast %cst_145 : f32 to vector<1x256xf32>
    %c49 = arith.constant 49 : index
    %394 = memref.load %arg2[%c49] : memref<98xf32, #tpu.memory_space<smem>>
    %c1_146 = arith.constant 1 : index
    %c0_147 = arith.constant 0 : index
    %c77_148 = arith.constant 77 : index
    %395 = vector.load %arg6[%c1_146, %c0_147, %c77_148] : memref<2x1x512xf32, #tpu.memory_space<vmem>>, vector<1x1x256xf32>
    %396 = vector.shape_cast %395 : vector<1x1x256xf32> to vector<1x256xf32>
    %397 = vector.broadcast %394 : f32 to vector<1x256xf32>
    %398 = arith.mulf %397, %396 : vector<1x256xf32>
    %399 = arith.addf %393, %398 : vector<1x256xf32>
    %c56 = arith.constant 56 : index
    %400 = memref.load %arg2[%c56] : memref<98xf32, #tpu.memory_space<smem>>
    %c1_149 = arith.constant 1 : index
    %c0_150 = arith.constant 0 : index
    %c93_151 = arith.constant 93 : index
    %401 = vector.load %arg6[%c1_149, %c0_150, %c93_151] : memref<2x1x512xf32, #tpu.memory_space<vmem>>, vector<1x1x256xf32>
    %402 = vector.shape_cast %401 : vector<1x1x256xf32> to vector<1x256xf32>
    %403 = vector.broadcast %400 : f32 to vector<1x256xf32>
    %404 = arith.mulf %403, %402 : vector<1x256xf32>
    %405 = arith.addf %399, %404 : vector<1x256xf32>
    %c63 = arith.constant 63 : index
    %406 = memref.load %arg2[%c63] : memref<98xf32, #tpu.memory_space<smem>>
    %c1_152 = arith.constant 1 : index
    %c0_153 = arith.constant 0 : index
    %c109_154 = arith.constant 109 : index
    %407 = vector.load %arg6[%c1_152, %c0_153, %c109_154] : memref<2x1x512xf32, #tpu.memory_space<vmem>>, vector<1x1x256xf32>
    %408 = vector.shape_cast %407 : vector<1x1x256xf32> to vector<1x256xf32>
    %409 = vector.broadcast %406 : f32 to vector<1x256xf32>
    %410 = arith.mulf %409, %408 : vector<1x256xf32>
    %411 = arith.addf %405, %410 : vector<1x256xf32>
    %c70 = arith.constant 70 : index
    %412 = memref.load %arg2[%c70] : memref<98xf32, #tpu.memory_space<smem>>
    %c1_155 = arith.constant 1 : index
    %c0_156 = arith.constant 0 : index
    %c125_157 = arith.constant 125 : index
    %413 = vector.load %arg6[%c1_155, %c0_156, %c125_157] : memref<2x1x512xf32, #tpu.memory_space<vmem>>, vector<1x1x256xf32>
    %414 = vector.shape_cast %413 : vector<1x1x256xf32> to vector<1x256xf32>
    %415 = vector.broadcast %412 : f32 to vector<1x256xf32>
    %416 = arith.mulf %415, %414 : vector<1x256xf32>
    %417 = arith.addf %411, %416 : vector<1x256xf32>
    %c77_158 = arith.constant 77 : index
    %418 = memref.load %arg2[%c77_158] : memref<98xf32, #tpu.memory_space<smem>>
    %c1_159 = arith.constant 1 : index
    %c0_160 = arith.constant 0 : index
    %c141_161 = arith.constant 141 : index
    %419 = vector.load %arg6[%c1_159, %c0_160, %c141_161] : memref<2x1x512xf32, #tpu.memory_space<vmem>>, vector<1x1x256xf32>
    %420 = vector.shape_cast %419 : vector<1x1x256xf32> to vector<1x256xf32>
    %421 = vector.broadcast %418 : f32 to vector<1x256xf32>
    %422 = arith.mulf %421, %420 : vector<1x256xf32>
    %423 = arith.addf %417, %422 : vector<1x256xf32>
    %c84 = arith.constant 84 : index
    %424 = memref.load %arg2[%c84] : memref<98xf32, #tpu.memory_space<smem>>
    %c1_162 = arith.constant 1 : index
    %c0_163 = arith.constant 0 : index
    %c157_164 = arith.constant 157 : index
    %425 = vector.load %arg6[%c1_162, %c0_163, %c157_164] : memref<2x1x512xf32, #tpu.memory_space<vmem>>, vector<1x1x256xf32>
    %426 = vector.shape_cast %425 : vector<1x1x256xf32> to vector<1x256xf32>
    %427 = vector.broadcast %424 : f32 to vector<1x256xf32>
    %428 = arith.mulf %427, %426 : vector<1x256xf32>
    %429 = arith.addf %423, %428 : vector<1x256xf32>
    %c91 = arith.constant 91 : index
    %430 = memref.load %arg2[%c91] : memref<98xf32, #tpu.memory_space<smem>>
    %c1_165 = arith.constant 1 : index
    %c0_166 = arith.constant 0 : index
    %c173_167 = arith.constant 173 : index
    %431 = vector.load %arg6[%c1_165, %c0_166, %c173_167] : memref<2x1x512xf32, #tpu.memory_space<vmem>>, vector<1x1x256xf32>
    %432 = vector.shape_cast %431 : vector<1x1x256xf32> to vector<1x256xf32>
    %433 = vector.broadcast %430 : f32 to vector<1x256xf32>
    %434 = arith.mulf %433, %432 : vector<1x256xf32>
    %435 = arith.addf %429, %434 : vector<1x256xf32>
    %c-3_i32_168 = arith.constant -3 : i32
    %436 = vector.broadcast %c-3_i32_168 : i32 to vector<1x256xi32>
    %437 = arith.addi %16, %436 : vector<1x256xi32>
    %c0_i32_169 = arith.constant 0 : i32
    %438 = vector.broadcast %c0_i32_169 : i32 to vector<1x256xi32>
    %439 = arith.cmpi sge, %437, %438 : vector<1x256xi32>
    %c-3_i32_170 = arith.constant -3 : i32
    %440 = vector.broadcast %c-3_i32_170 : i32 to vector<1x256xi32>
    %441 = arith.addi %16, %440 : vector<1x256xi32>
    %c16_i32_171 = arith.constant 16 : i32
    %442 = vector.broadcast %c16_i32_171 : i32 to vector<1x256xi32>
    %443 = arith.cmpi slt, %441, %442 : vector<1x256xi32>
    %444 = arith.andi %439, %443 : vector<1x256xi1>
    %cst_172 = arith.constant 0.000000e+00 : f32
    %445 = vector.broadcast %cst_172 : f32 to vector<1x256xf32>
    %446 = arith.select %444, %435, %445 : vector<1x256xi1>, vector<1x256xf32>
    %447 = arith.addf %392, %446 : vector<1x256xf32>
    %cst_173 = arith.constant 0.000000e+00 : f32
    %448 = vector.broadcast %cst_173 : f32 to vector<1x256xf32>
    %c50 = arith.constant 50 : index
    %449 = memref.load %arg2[%c50] : memref<98xf32, #tpu.memory_space<smem>>
    %c1_174 = arith.constant 1 : index
    %c0_175 = arith.constant 0 : index
    %c78_176 = arith.constant 78 : index
    %450 = vector.load %arg6[%c1_174, %c0_175, %c78_176] : memref<2x1x512xf32, #tpu.memory_space<vmem>>, vector<1x1x256xf32>
    %451 = vector.shape_cast %450 : vector<1x1x256xf32> to vector<1x256xf32>
    %452 = vector.broadcast %449 : f32 to vector<1x256xf32>
    %453 = arith.mulf %452, %451 : vector<1x256xf32>
    %454 = arith.addf %448, %453 : vector<1x256xf32>
    %c57 = arith.constant 57 : index
    %455 = memref.load %arg2[%c57] : memref<98xf32, #tpu.memory_space<smem>>
    %c1_177 = arith.constant 1 : index
    %c0_178 = arith.constant 0 : index
    %c94_179 = arith.constant 94 : index
    %456 = vector.load %arg6[%c1_177, %c0_178, %c94_179] : memref<2x1x512xf32, #tpu.memory_space<vmem>>, vector<1x1x256xf32>
    %457 = vector.shape_cast %456 : vector<1x1x256xf32> to vector<1x256xf32>
    %458 = vector.broadcast %455 : f32 to vector<1x256xf32>
    %459 = arith.mulf %458, %457 : vector<1x256xf32>
    %460 = arith.addf %454, %459 : vector<1x256xf32>
    %c64 = arith.constant 64 : index
    %461 = memref.load %arg2[%c64] : memref<98xf32, #tpu.memory_space<smem>>
    %c1_180 = arith.constant 1 : index
    %c0_181 = arith.constant 0 : index
    %c110_182 = arith.constant 110 : index
    %462 = vector.load %arg6[%c1_180, %c0_181, %c110_182] : memref<2x1x512xf32, #tpu.memory_space<vmem>>, vector<1x1x256xf32>
    %463 = vector.shape_cast %462 : vector<1x1x256xf32> to vector<1x256xf32>
    %464 = vector.broadcast %461 : f32 to vector<1x256xf32>
    %465 = arith.mulf %464, %463 : vector<1x256xf32>
    %466 = arith.addf %460, %465 : vector<1x256xf32>
    %c71 = arith.constant 71 : index
    %467 = memref.load %arg2[%c71] : memref<98xf32, #tpu.memory_space<smem>>
    %c1_183 = arith.constant 1 : index
    %c0_184 = arith.constant 0 : index
    %c126_185 = arith.constant 126 : index
    %468 = vector.load %arg6[%c1_183, %c0_184, %c126_185] : memref<2x1x512xf32, #tpu.memory_space<vmem>>, vector<1x1x256xf32>
    %469 = vector.shape_cast %468 : vector<1x1x256xf32> to vector<1x256xf32>
    %470 = vector.broadcast %467 : f32 to vector<1x256xf32>
    %471 = arith.mulf %470, %469 : vector<1x256xf32>
    %472 = arith.addf %466, %471 : vector<1x256xf32>
    %c78_186 = arith.constant 78 : index
    %473 = memref.load %arg2[%c78_186] : memref<98xf32, #tpu.memory_space<smem>>
    %c1_187 = arith.constant 1 : index
    %c0_188 = arith.constant 0 : index
    %c142_189 = arith.constant 142 : index
    %474 = vector.load %arg6[%c1_187, %c0_188, %c142_189] : memref<2x1x512xf32, #tpu.memory_space<vmem>>, vector<1x1x256xf32>
    %475 = vector.shape_cast %474 : vector<1x1x256xf32> to vector<1x256xf32>
    %476 = vector.broadcast %473 : f32 to vector<1x256xf32>
    %477 = arith.mulf %476, %475 : vector<1x256xf32>
    %478 = arith.addf %472, %477 : vector<1x256xf32>
    %c85 = arith.constant 85 : index
    %479 = memref.load %arg2[%c85] : memref<98xf32, #tpu.memory_space<smem>>
    %c1_190 = arith.constant 1 : index
    %c0_191 = arith.constant 0 : index
    %c158_192 = arith.constant 158 : index
    %480 = vector.load %arg6[%c1_190, %c0_191, %c158_192] : memref<2x1x512xf32, #tpu.memory_space<vmem>>, vector<1x1x256xf32>
    %481 = vector.shape_cast %480 : vector<1x1x256xf32> to vector<1x256xf32>
    %482 = vector.broadcast %479 : f32 to vector<1x256xf32>
    %483 = arith.mulf %482, %481 : vector<1x256xf32>
    %484 = arith.addf %478, %483 : vector<1x256xf32>
    %c92 = arith.constant 92 : index
    %485 = memref.load %arg2[%c92] : memref<98xf32, #tpu.memory_space<smem>>
    %c1_193 = arith.constant 1 : index
    %c0_194 = arith.constant 0 : index
    %c174_195 = arith.constant 174 : index
    %486 = vector.load %arg6[%c1_193, %c0_194, %c174_195] : memref<2x1x512xf32, #tpu.memory_space<vmem>>, vector<1x1x256xf32>
    %487 = vector.shape_cast %486 : vector<1x1x256xf32> to vector<1x256xf32>
    %488 = vector.broadcast %485 : f32 to vector<1x256xf32>
    %489 = arith.mulf %488, %487 : vector<1x256xf32>
    %490 = arith.addf %484, %489 : vector<1x256xf32>
    %c-2_i32_196 = arith.constant -2 : i32
    %491 = vector.broadcast %c-2_i32_196 : i32 to vector<1x256xi32>
    %492 = arith.addi %16, %491 : vector<1x256xi32>
    %c0_i32_197 = arith.constant 0 : i32
    %493 = vector.broadcast %c0_i32_197 : i32 to vector<1x256xi32>
    %494 = arith.cmpi sge, %492, %493 : vector<1x256xi32>
    %c-2_i32_198 = arith.constant -2 : i32
    %495 = vector.broadcast %c-2_i32_198 : i32 to vector<1x256xi32>
    %496 = arith.addi %16, %495 : vector<1x256xi32>
    %c16_i32_199 = arith.constant 16 : i32
    %497 = vector.broadcast %c16_i32_199 : i32 to vector<1x256xi32>
    %498 = arith.cmpi slt, %496, %497 : vector<1x256xi32>
    %499 = arith.andi %494, %498 : vector<1x256xi1>
    %cst_200 = arith.constant 0.000000e+00 : f32
    %500 = vector.broadcast %cst_200 : f32 to vector<1x256xf32>
    %501 = arith.select %499, %490, %500 : vector<1x256xi1>, vector<1x256xf32>
    %502 = arith.addf %447, %501 : vector<1x256xf32>
    %cst_201 = arith.constant 0.000000e+00 : f32
    %503 = vector.broadcast %cst_201 : f32 to vector<1x256xf32>
    %c51 = arith.constant 51 : index
    %504 = memref.load %arg2[%c51] : memref<98xf32, #tpu.memory_space<smem>>
    %c1_202 = arith.constant 1 : index
    %c0_203 = arith.constant 0 : index
    %c79_204 = arith.constant 79 : index
    %505 = vector.load %arg6[%c1_202, %c0_203, %c79_204] : memref<2x1x512xf32, #tpu.memory_space<vmem>>, vector<1x1x256xf32>
    %506 = vector.shape_cast %505 : vector<1x1x256xf32> to vector<1x256xf32>
    %507 = vector.broadcast %504 : f32 to vector<1x256xf32>
    %508 = arith.mulf %507, %506 : vector<1x256xf32>
    %509 = arith.addf %503, %508 : vector<1x256xf32>
    %c58 = arith.constant 58 : index
    %510 = memref.load %arg2[%c58] : memref<98xf32, #tpu.memory_space<smem>>
    %c1_205 = arith.constant 1 : index
    %c0_206 = arith.constant 0 : index
    %c95_207 = arith.constant 95 : index
    %511 = vector.load %arg6[%c1_205, %c0_206, %c95_207] : memref<2x1x512xf32, #tpu.memory_space<vmem>>, vector<1x1x256xf32>
    %512 = vector.shape_cast %511 : vector<1x1x256xf32> to vector<1x256xf32>
    %513 = vector.broadcast %510 : f32 to vector<1x256xf32>
    %514 = arith.mulf %513, %512 : vector<1x256xf32>
    %515 = arith.addf %509, %514 : vector<1x256xf32>
    %c65 = arith.constant 65 : index
    %516 = memref.load %arg2[%c65] : memref<98xf32, #tpu.memory_space<smem>>
    %c1_208 = arith.constant 1 : index
    %c0_209 = arith.constant 0 : index
    %c111_210 = arith.constant 111 : index
    %517 = vector.load %arg6[%c1_208, %c0_209, %c111_210] : memref<2x1x512xf32, #tpu.memory_space<vmem>>, vector<1x1x256xf32>
    %518 = vector.shape_cast %517 : vector<1x1x256xf32> to vector<1x256xf32>
    %519 = vector.broadcast %516 : f32 to vector<1x256xf32>
    %520 = arith.mulf %519, %518 : vector<1x256xf32>
    %521 = arith.addf %515, %520 : vector<1x256xf32>
    %c72 = arith.constant 72 : index
    %522 = memref.load %arg2[%c72] : memref<98xf32, #tpu.memory_space<smem>>
    %c1_211 = arith.constant 1 : index
    %c0_212 = arith.constant 0 : index
    %c127_213 = arith.constant 127 : index
    %523 = vector.load %arg6[%c1_211, %c0_212, %c127_213] : memref<2x1x512xf32, #tpu.memory_space<vmem>>, vector<1x1x256xf32>
    %524 = vector.shape_cast %523 : vector<1x1x256xf32> to vector<1x256xf32>
    %525 = vector.broadcast %522 : f32 to vector<1x256xf32>
    %526 = arith.mulf %525, %524 : vector<1x256xf32>
    %527 = arith.addf %521, %526 : vector<1x256xf32>
    %c79_214 = arith.constant 79 : index
    %528 = memref.load %arg2[%c79_214] : memref<98xf32, #tpu.memory_space<smem>>
    %c1_215 = arith.constant 1 : index
    %c0_216 = arith.constant 0 : index
    %c143_217 = arith.constant 143 : index
    %529 = vector.load %arg6[%c1_215, %c0_216, %c143_217] : memref<2x1x512xf32, #tpu.memory_space<vmem>>, vector<1x1x256xf32>
    %530 = vector.shape_cast %529 : vector<1x1x256xf32> to vector<1x256xf32>
    %531 = vector.broadcast %528 : f32 to vector<1x256xf32>
    %532 = arith.mulf %531, %530 : vector<1x256xf32>
    %533 = arith.addf %527, %532 : vector<1x256xf32>
    %c86 = arith.constant 86 : index
    %534 = memref.load %arg2[%c86] : memref<98xf32, #tpu.memory_space<smem>>
    %c1_218 = arith.constant 1 : index
    %c0_219 = arith.constant 0 : index
    %c159_220 = arith.constant 159 : index
    %535 = vector.load %arg6[%c1_218, %c0_219, %c159_220] : memref<2x1x512xf32, #tpu.memory_space<vmem>>, vector<1x1x256xf32>
    %536 = vector.shape_cast %535 : vector<1x1x256xf32> to vector<1x256xf32>
    %537 = vector.broadcast %534 : f32 to vector<1x256xf32>
    %538 = arith.mulf %537, %536 : vector<1x256xf32>
    %539 = arith.addf %533, %538 : vector<1x256xf32>
    %c93_221 = arith.constant 93 : index
    %540 = memref.load %arg2[%c93_221] : memref<98xf32, #tpu.memory_space<smem>>
    %c1_222 = arith.constant 1 : index
    %c0_223 = arith.constant 0 : index
    %c175_224 = arith.constant 175 : index
    %541 = vector.load %arg6[%c1_222, %c0_223, %c175_224] : memref<2x1x512xf32, #tpu.memory_space<vmem>>, vector<1x1x256xf32>
    %542 = vector.shape_cast %541 : vector<1x1x256xf32> to vector<1x256xf32>
    %543 = vector.broadcast %540 : f32 to vector<1x256xf32>
    %544 = arith.mulf %543, %542 : vector<1x256xf32>
    %545 = arith.addf %539, %544 : vector<1x256xf32>
    %c-1_i32_225 = arith.constant -1 : i32
    %546 = vector.broadcast %c-1_i32_225 : i32 to vector<1x256xi32>
    %547 = arith.addi %16, %546 : vector<1x256xi32>
    %c0_i32_226 = arith.constant 0 : i32
    %548 = vector.broadcast %c0_i32_226 : i32 to vector<1x256xi32>
    %549 = arith.cmpi sge, %547, %548 : vector<1x256xi32>
    %c-1_i32_227 = arith.constant -1 : i32
    %550 = vector.broadcast %c-1_i32_227 : i32 to vector<1x256xi32>
    %551 = arith.addi %16, %550 : vector<1x256xi32>
    %c16_i32_228 = arith.constant 16 : i32
    %552 = vector.broadcast %c16_i32_228 : i32 to vector<1x256xi32>
    %553 = arith.cmpi slt, %551, %552 : vector<1x256xi32>
    %554 = arith.andi %549, %553 : vector<1x256xi1>
    %cst_229 = arith.constant 0.000000e+00 : f32
    %555 = vector.broadcast %cst_229 : f32 to vector<1x256xf32>
    %556 = arith.select %554, %545, %555 : vector<1x256xi1>, vector<1x256xf32>
    %557 = arith.addf %502, %556 : vector<1x256xf32>
    %cst_230 = arith.constant 0.000000e+00 : f32
    %558 = vector.broadcast %cst_230 : f32 to vector<1x256xf32>
    %c52 = arith.constant 52 : index
    %559 = memref.load %arg2[%c52] : memref<98xf32, #tpu.memory_space<smem>>
    %c1_231 = arith.constant 1 : index
    %c0_232 = arith.constant 0 : index
    %c80_233 = arith.constant 80 : index
    %560 = vector.load %arg6[%c1_231, %c0_232, %c80_233] : memref<2x1x512xf32, #tpu.memory_space<vmem>>, vector<1x1x256xf32>
    %561 = vector.shape_cast %560 : vector<1x1x256xf32> to vector<1x256xf32>
    %562 = vector.broadcast %559 : f32 to vector<1x256xf32>
    %563 = arith.mulf %562, %561 : vector<1x256xf32>
    %564 = arith.addf %558, %563 : vector<1x256xf32>
    %c59 = arith.constant 59 : index
    %565 = memref.load %arg2[%c59] : memref<98xf32, #tpu.memory_space<smem>>
    %c1_234 = arith.constant 1 : index
    %c0_235 = arith.constant 0 : index
    %c96_236 = arith.constant 96 : index
    %566 = vector.load %arg6[%c1_234, %c0_235, %c96_236] : memref<2x1x512xf32, #tpu.memory_space<vmem>>, vector<1x1x256xf32>
    %567 = vector.shape_cast %566 : vector<1x1x256xf32> to vector<1x256xf32>
    %568 = vector.broadcast %565 : f32 to vector<1x256xf32>
    %569 = arith.mulf %568, %567 : vector<1x256xf32>
    %570 = arith.addf %564, %569 : vector<1x256xf32>
    %c66 = arith.constant 66 : index
    %571 = memref.load %arg2[%c66] : memref<98xf32, #tpu.memory_space<smem>>
    %c1_237 = arith.constant 1 : index
    %c0_238 = arith.constant 0 : index
    %c112_239 = arith.constant 112 : index
    %572 = vector.load %arg6[%c1_237, %c0_238, %c112_239] : memref<2x1x512xf32, #tpu.memory_space<vmem>>, vector<1x1x256xf32>
    %573 = vector.shape_cast %572 : vector<1x1x256xf32> to vector<1x256xf32>
    %574 = vector.broadcast %571 : f32 to vector<1x256xf32>
    %575 = arith.mulf %574, %573 : vector<1x256xf32>
    %576 = arith.addf %570, %575 : vector<1x256xf32>
    %c73 = arith.constant 73 : index
    %577 = memref.load %arg2[%c73] : memref<98xf32, #tpu.memory_space<smem>>
    %c1_240 = arith.constant 1 : index
    %c0_241 = arith.constant 0 : index
    %c128_242 = arith.constant 128 : index
    %578 = vector.load %arg6[%c1_240, %c0_241, %c128_242] : memref<2x1x512xf32, #tpu.memory_space<vmem>>, vector<1x1x256xf32>
    %579 = vector.shape_cast %578 : vector<1x1x256xf32> to vector<1x256xf32>
    %580 = vector.broadcast %577 : f32 to vector<1x256xf32>
    %581 = arith.mulf %580, %579 : vector<1x256xf32>
    %582 = arith.addf %576, %581 : vector<1x256xf32>
    %c80_243 = arith.constant 80 : index
    %583 = memref.load %arg2[%c80_243] : memref<98xf32, #tpu.memory_space<smem>>
    %c1_244 = arith.constant 1 : index
    %c0_245 = arith.constant 0 : index
    %c144_246 = arith.constant 144 : index
    %584 = vector.load %arg6[%c1_244, %c0_245, %c144_246] : memref<2x1x512xf32, #tpu.memory_space<vmem>>, vector<1x1x256xf32>
    %585 = vector.shape_cast %584 : vector<1x1x256xf32> to vector<1x256xf32>
    %586 = vector.broadcast %583 : f32 to vector<1x256xf32>
    %587 = arith.mulf %586, %585 : vector<1x256xf32>
    %588 = arith.addf %582, %587 : vector<1x256xf32>
    %c87 = arith.constant 87 : index
    %589 = memref.load %arg2[%c87] : memref<98xf32, #tpu.memory_space<smem>>
    %c1_247 = arith.constant 1 : index
    %c0_248 = arith.constant 0 : index
    %c160_249 = arith.constant 160 : index
    %590 = vector.load %arg6[%c1_247, %c0_248, %c160_249] : memref<2x1x512xf32, #tpu.memory_space<vmem>>, vector<1x1x256xf32>
    %591 = vector.shape_cast %590 : vector<1x1x256xf32> to vector<1x256xf32>
    %592 = vector.broadcast %589 : f32 to vector<1x256xf32>
    %593 = arith.mulf %592, %591 : vector<1x256xf32>
    %594 = arith.addf %588, %593 : vector<1x256xf32>
    %c94_250 = arith.constant 94 : index
    %595 = memref.load %arg2[%c94_250] : memref<98xf32, #tpu.memory_space<smem>>
    %c1_251 = arith.constant 1 : index
    %c0_252 = arith.constant 0 : index
    %c176_253 = arith.constant 176 : index
    %596 = vector.load %arg6[%c1_251, %c0_252, %c176_253] : memref<2x1x512xf32, #tpu.memory_space<vmem>>, vector<1x1x256xf32>
    %597 = vector.shape_cast %596 : vector<1x1x256xf32> to vector<1x256xf32>
    %598 = vector.broadcast %595 : f32 to vector<1x256xf32>
    %599 = arith.mulf %598, %597 : vector<1x256xf32>
    %600 = arith.addf %594, %599 : vector<1x256xf32>
    %601 = arith.addf %557, %600 : vector<1x256xf32>
    %cst_254 = arith.constant 0.000000e+00 : f32
    %602 = vector.broadcast %cst_254 : f32 to vector<1x256xf32>
    %c53 = arith.constant 53 : index
    %603 = memref.load %arg2[%c53] : memref<98xf32, #tpu.memory_space<smem>>
    %c1_255 = arith.constant 1 : index
    %c0_256 = arith.constant 0 : index
    %c81_257 = arith.constant 81 : index
    %604 = vector.load %arg6[%c1_255, %c0_256, %c81_257] : memref<2x1x512xf32, #tpu.memory_space<vmem>>, vector<1x1x256xf32>
    %605 = vector.shape_cast %604 : vector<1x1x256xf32> to vector<1x256xf32>
    %606 = vector.broadcast %603 : f32 to vector<1x256xf32>
    %607 = arith.mulf %606, %605 : vector<1x256xf32>
    %608 = arith.addf %602, %607 : vector<1x256xf32>
    %c60 = arith.constant 60 : index
    %609 = memref.load %arg2[%c60] : memref<98xf32, #tpu.memory_space<smem>>
    %c1_258 = arith.constant 1 : index
    %c0_259 = arith.constant 0 : index
    %c97_260 = arith.constant 97 : index
    %610 = vector.load %arg6[%c1_258, %c0_259, %c97_260] : memref<2x1x512xf32, #tpu.memory_space<vmem>>, vector<1x1x256xf32>
    %611 = vector.shape_cast %610 : vector<1x1x256xf32> to vector<1x256xf32>
    %612 = vector.broadcast %609 : f32 to vector<1x256xf32>
    %613 = arith.mulf %612, %611 : vector<1x256xf32>
    %614 = arith.addf %608, %613 : vector<1x256xf32>
    %c67 = arith.constant 67 : index
    %615 = memref.load %arg2[%c67] : memref<98xf32, #tpu.memory_space<smem>>
    %c1_261 = arith.constant 1 : index
    %c0_262 = arith.constant 0 : index
    %c113_263 = arith.constant 113 : index
    %616 = vector.load %arg6[%c1_261, %c0_262, %c113_263] : memref<2x1x512xf32, #tpu.memory_space<vmem>>, vector<1x1x256xf32>
    %617 = vector.shape_cast %616 : vector<1x1x256xf32> to vector<1x256xf32>
    %618 = vector.broadcast %615 : f32 to vector<1x256xf32>
    %619 = arith.mulf %618, %617 : vector<1x256xf32>
    %620 = arith.addf %614, %619 : vector<1x256xf32>
    %c74 = arith.constant 74 : index
    %621 = memref.load %arg2[%c74] : memref<98xf32, #tpu.memory_space<smem>>
    %c1_264 = arith.constant 1 : index
    %c0_265 = arith.constant 0 : index
    %c129_266 = arith.constant 129 : index
    %622 = vector.load %arg6[%c1_264, %c0_265, %c129_266] : memref<2x1x512xf32, #tpu.memory_space<vmem>>, vector<1x1x256xf32>
    %623 = vector.shape_cast %622 : vector<1x1x256xf32> to vector<1x256xf32>
    %624 = vector.broadcast %621 : f32 to vector<1x256xf32>
    %625 = arith.mulf %624, %623 : vector<1x256xf32>
    %626 = arith.addf %620, %625 : vector<1x256xf32>
    %c81_267 = arith.constant 81 : index
    %627 = memref.load %arg2[%c81_267] : memref<98xf32, #tpu.memory_space<smem>>
    %c1_268 = arith.constant 1 : index
    %c0_269 = arith.constant 0 : index
    %c145_270 = arith.constant 145 : index
    %628 = vector.load %arg6[%c1_268, %c0_269, %c145_270] : memref<2x1x512xf32, #tpu.memory_space<vmem>>, vector<1x1x256xf32>
    %629 = vector.shape_cast %628 : vector<1x1x256xf32> to vector<1x256xf32>
    %630 = vector.broadcast %627 : f32 to vector<1x256xf32>
    %631 = arith.mulf %630, %629 : vector<1x256xf32>
    %632 = arith.addf %626, %631 : vector<1x256xf32>
    %c88 = arith.constant 88 : index
    %633 = memref.load %arg2[%c88] : memref<98xf32, #tpu.memory_space<smem>>
    %c1_271 = arith.constant 1 : index
    %c0_272 = arith.constant 0 : index
    %c161_273 = arith.constant 161 : index
    %634 = vector.load %arg6[%c1_271, %c0_272, %c161_273] : memref<2x1x512xf32, #tpu.memory_space<vmem>>, vector<1x1x256xf32>
    %635 = vector.shape_cast %634 : vector<1x1x256xf32> to vector<1x256xf32>
    %636 = vector.broadcast %633 : f32 to vector<1x256xf32>
    %637 = arith.mulf %636, %635 : vector<1x256xf32>
    %638 = arith.addf %632, %637 : vector<1x256xf32>
    %c95_274 = arith.constant 95 : index
    %639 = memref.load %arg2[%c95_274] : memref<98xf32, #tpu.memory_space<smem>>
    %c1_275 = arith.constant 1 : index
    %c0_276 = arith.constant 0 : index
    %c177_277 = arith.constant 177 : index
    %640 = vector.load %arg6[%c1_275, %c0_276, %c177_277] : memref<2x1x512xf32, #tpu.memory_space<vmem>>, vector<1x1x256xf32>
    %641 = vector.shape_cast %640 : vector<1x1x256xf32> to vector<1x256xf32>
    %642 = vector.broadcast %639 : f32 to vector<1x256xf32>
    %643 = arith.mulf %642, %641 : vector<1x256xf32>
    %644 = arith.addf %638, %643 : vector<1x256xf32>
    %c1_i32_278 = arith.constant 1 : i32
    %645 = vector.broadcast %c1_i32_278 : i32 to vector<1x256xi32>
    %646 = arith.addi %16, %645 : vector<1x256xi32>
    %c0_i32_279 = arith.constant 0 : i32
    %647 = vector.broadcast %c0_i32_279 : i32 to vector<1x256xi32>
    %648 = arith.cmpi sge, %646, %647 : vector<1x256xi32>
    %c1_i32_280 = arith.constant 1 : i32
    %649 = vector.broadcast %c1_i32_280 : i32 to vector<1x256xi32>
    %650 = arith.addi %16, %649 : vector<1x256xi32>
    %c16_i32_281 = arith.constant 16 : i32
    %651 = vector.broadcast %c16_i32_281 : i32 to vector<1x256xi32>
    %652 = arith.cmpi slt, %650, %651 : vector<1x256xi32>
    %653 = arith.andi %648, %652 : vector<1x256xi1>
    %cst_282 = arith.constant 0.000000e+00 : f32
    %654 = vector.broadcast %cst_282 : f32 to vector<1x256xf32>
    %655 = arith.select %653, %644, %654 : vector<1x256xi1>, vector<1x256xf32>
    %656 = arith.addf %601, %655 : vector<1x256xf32>
    %cst_283 = arith.constant 0.000000e+00 : f32
    %657 = vector.broadcast %cst_283 : f32 to vector<1x256xf32>
    %c54 = arith.constant 54 : index
    %658 = memref.load %arg2[%c54] : memref<98xf32, #tpu.memory_space<smem>>
    %c1_284 = arith.constant 1 : index
    %c0_285 = arith.constant 0 : index
    %c82_286 = arith.constant 82 : index
    %659 = vector.load %arg6[%c1_284, %c0_285, %c82_286] : memref<2x1x512xf32, #tpu.memory_space<vmem>>, vector<1x1x256xf32>
    %660 = vector.shape_cast %659 : vector<1x1x256xf32> to vector<1x256xf32>
    %661 = vector.broadcast %658 : f32 to vector<1x256xf32>
    %662 = arith.mulf %661, %660 : vector<1x256xf32>
    %663 = arith.addf %657, %662 : vector<1x256xf32>
    %c61 = arith.constant 61 : index
    %664 = memref.load %arg2[%c61] : memref<98xf32, #tpu.memory_space<smem>>
    %c1_287 = arith.constant 1 : index
    %c0_288 = arith.constant 0 : index
    %c98_289 = arith.constant 98 : index
    %665 = vector.load %arg6[%c1_287, %c0_288, %c98_289] : memref<2x1x512xf32, #tpu.memory_space<vmem>>, vector<1x1x256xf32>
    %666 = vector.shape_cast %665 : vector<1x1x256xf32> to vector<1x256xf32>
    %667 = vector.broadcast %664 : f32 to vector<1x256xf32>
    %668 = arith.mulf %667, %666 : vector<1x256xf32>
    %669 = arith.addf %663, %668 : vector<1x256xf32>
    %c68 = arith.constant 68 : index
    %670 = memref.load %arg2[%c68] : memref<98xf32, #tpu.memory_space<smem>>
    %c1_290 = arith.constant 1 : index
    %c0_291 = arith.constant 0 : index
    %c114_292 = arith.constant 114 : index
    %671 = vector.load %arg6[%c1_290, %c0_291, %c114_292] : memref<2x1x512xf32, #tpu.memory_space<vmem>>, vector<1x1x256xf32>
    %672 = vector.shape_cast %671 : vector<1x1x256xf32> to vector<1x256xf32>
    %673 = vector.broadcast %670 : f32 to vector<1x256xf32>
    %674 = arith.mulf %673, %672 : vector<1x256xf32>
    %675 = arith.addf %669, %674 : vector<1x256xf32>
    %c75 = arith.constant 75 : index
    %676 = memref.load %arg2[%c75] : memref<98xf32, #tpu.memory_space<smem>>
    %c1_293 = arith.constant 1 : index
    %c0_294 = arith.constant 0 : index
    %c130_295 = arith.constant 130 : index
    %677 = vector.load %arg6[%c1_293, %c0_294, %c130_295] : memref<2x1x512xf32, #tpu.memory_space<vmem>>, vector<1x1x256xf32>
    %678 = vector.shape_cast %677 : vector<1x1x256xf32> to vector<1x256xf32>
    %679 = vector.broadcast %676 : f32 to vector<1x256xf32>
    %680 = arith.mulf %679, %678 : vector<1x256xf32>
    %681 = arith.addf %675, %680 : vector<1x256xf32>
    %c82_296 = arith.constant 82 : index
    %682 = memref.load %arg2[%c82_296] : memref<98xf32, #tpu.memory_space<smem>>
    %c1_297 = arith.constant 1 : index
    %c0_298 = arith.constant 0 : index
    %c146_299 = arith.constant 146 : index
    %683 = vector.load %arg6[%c1_297, %c0_298, %c146_299] : memref<2x1x512xf32, #tpu.memory_space<vmem>>, vector<1x1x256xf32>
    %684 = vector.shape_cast %683 : vector<1x1x256xf32> to vector<1x256xf32>
    %685 = vector.broadcast %682 : f32 to vector<1x256xf32>
    %686 = arith.mulf %685, %684 : vector<1x256xf32>
    %687 = arith.addf %681, %686 : vector<1x256xf32>
    %c89 = arith.constant 89 : index
    %688 = memref.load %arg2[%c89] : memref<98xf32, #tpu.memory_space<smem>>
    %c1_300 = arith.constant 1 : index
    %c0_301 = arith.constant 0 : index
    %c162_302 = arith.constant 162 : index
    %689 = vector.load %arg6[%c1_300, %c0_301, %c162_302] : memref<2x1x512xf32, #tpu.memory_space<vmem>>, vector<1x1x256xf32>
    %690 = vector.shape_cast %689 : vector<1x1x256xf32> to vector<1x256xf32>
    %691 = vector.broadcast %688 : f32 to vector<1x256xf32>
    %692 = arith.mulf %691, %690 : vector<1x256xf32>
    %693 = arith.addf %687, %692 : vector<1x256xf32>
    %c96_303 = arith.constant 96 : index
    %694 = memref.load %arg2[%c96_303] : memref<98xf32, #tpu.memory_space<smem>>
    %c1_304 = arith.constant 1 : index
    %c0_305 = arith.constant 0 : index
    %c178_306 = arith.constant 178 : index
    %695 = vector.load %arg6[%c1_304, %c0_305, %c178_306] : memref<2x1x512xf32, #tpu.memory_space<vmem>>, vector<1x1x256xf32>
    %696 = vector.shape_cast %695 : vector<1x1x256xf32> to vector<1x256xf32>
    %697 = vector.broadcast %694 : f32 to vector<1x256xf32>
    %698 = arith.mulf %697, %696 : vector<1x256xf32>
    %699 = arith.addf %693, %698 : vector<1x256xf32>
    %c2_i32_307 = arith.constant 2 : i32
    %700 = vector.broadcast %c2_i32_307 : i32 to vector<1x256xi32>
    %701 = arith.addi %16, %700 : vector<1x256xi32>
    %c0_i32_308 = arith.constant 0 : i32
    %702 = vector.broadcast %c0_i32_308 : i32 to vector<1x256xi32>
    %703 = arith.cmpi sge, %701, %702 : vector<1x256xi32>
    %c2_i32_309 = arith.constant 2 : i32
    %704 = vector.broadcast %c2_i32_309 : i32 to vector<1x256xi32>
    %705 = arith.addi %16, %704 : vector<1x256xi32>
    %c16_i32_310 = arith.constant 16 : i32
    %706 = vector.broadcast %c16_i32_310 : i32 to vector<1x256xi32>
    %707 = arith.cmpi slt, %705, %706 : vector<1x256xi32>
    %708 = arith.andi %703, %707 : vector<1x256xi1>
    %cst_311 = arith.constant 0.000000e+00 : f32
    %709 = vector.broadcast %cst_311 : f32 to vector<1x256xf32>
    %710 = arith.select %708, %699, %709 : vector<1x256xi1>, vector<1x256xf32>
    %711 = arith.addf %656, %710 : vector<1x256xf32>
    %cst_312 = arith.constant 0.000000e+00 : f32
    %712 = vector.broadcast %cst_312 : f32 to vector<1x256xf32>
    %c55 = arith.constant 55 : index
    %713 = memref.load %arg2[%c55] : memref<98xf32, #tpu.memory_space<smem>>
    %c1_313 = arith.constant 1 : index
    %c0_314 = arith.constant 0 : index
    %c83_315 = arith.constant 83 : index
    %714 = vector.load %arg6[%c1_313, %c0_314, %c83_315] : memref<2x1x512xf32, #tpu.memory_space<vmem>>, vector<1x1x256xf32>
    %715 = vector.shape_cast %714 : vector<1x1x256xf32> to vector<1x256xf32>
    %716 = vector.broadcast %713 : f32 to vector<1x256xf32>
    %717 = arith.mulf %716, %715 : vector<1x256xf32>
    %718 = arith.addf %712, %717 : vector<1x256xf32>
    %c62 = arith.constant 62 : index
    %719 = memref.load %arg2[%c62] : memref<98xf32, #tpu.memory_space<smem>>
    %c1_316 = arith.constant 1 : index
    %c0_317 = arith.constant 0 : index
    %c99_318 = arith.constant 99 : index
    %720 = vector.load %arg6[%c1_316, %c0_317, %c99_318] : memref<2x1x512xf32, #tpu.memory_space<vmem>>, vector<1x1x256xf32>
    %721 = vector.shape_cast %720 : vector<1x1x256xf32> to vector<1x256xf32>
    %722 = vector.broadcast %719 : f32 to vector<1x256xf32>
    %723 = arith.mulf %722, %721 : vector<1x256xf32>
    %724 = arith.addf %718, %723 : vector<1x256xf32>
    %c69 = arith.constant 69 : index
    %725 = memref.load %arg2[%c69] : memref<98xf32, #tpu.memory_space<smem>>
    %c1_319 = arith.constant 1 : index
    %c0_320 = arith.constant 0 : index
    %c115_321 = arith.constant 115 : index
    %726 = vector.load %arg6[%c1_319, %c0_320, %c115_321] : memref<2x1x512xf32, #tpu.memory_space<vmem>>, vector<1x1x256xf32>
    %727 = vector.shape_cast %726 : vector<1x1x256xf32> to vector<1x256xf32>
    %728 = vector.broadcast %725 : f32 to vector<1x256xf32>
    %729 = arith.mulf %728, %727 : vector<1x256xf32>
    %730 = arith.addf %724, %729 : vector<1x256xf32>
    %c76 = arith.constant 76 : index
    %731 = memref.load %arg2[%c76] : memref<98xf32, #tpu.memory_space<smem>>
    %c1_322 = arith.constant 1 : index
    %c0_323 = arith.constant 0 : index
    %c131_324 = arith.constant 131 : index
    %732 = vector.load %arg6[%c1_322, %c0_323, %c131_324] : memref<2x1x512xf32, #tpu.memory_space<vmem>>, vector<1x1x256xf32>
    %733 = vector.shape_cast %732 : vector<1x1x256xf32> to vector<1x256xf32>
    %734 = vector.broadcast %731 : f32 to vector<1x256xf32>
    %735 = arith.mulf %734, %733 : vector<1x256xf32>
    %736 = arith.addf %730, %735 : vector<1x256xf32>
    %c83_325 = arith.constant 83 : index
    %737 = memref.load %arg2[%c83_325] : memref<98xf32, #tpu.memory_space<smem>>
    %c1_326 = arith.constant 1 : index
    %c0_327 = arith.constant 0 : index
    %c147_328 = arith.constant 147 : index
    %738 = vector.load %arg6[%c1_326, %c0_327, %c147_328] : memref<2x1x512xf32, #tpu.memory_space<vmem>>, vector<1x1x256xf32>
    %739 = vector.shape_cast %738 : vector<1x1x256xf32> to vector<1x256xf32>
    %740 = vector.broadcast %737 : f32 to vector<1x256xf32>
    %741 = arith.mulf %740, %739 : vector<1x256xf32>
    %742 = arith.addf %736, %741 : vector<1x256xf32>
    %c90 = arith.constant 90 : index
    %743 = memref.load %arg2[%c90] : memref<98xf32, #tpu.memory_space<smem>>
    %c1_329 = arith.constant 1 : index
    %c0_330 = arith.constant 0 : index
    %c163_331 = arith.constant 163 : index
    %744 = vector.load %arg6[%c1_329, %c0_330, %c163_331] : memref<2x1x512xf32, #tpu.memory_space<vmem>>, vector<1x1x256xf32>
    %745 = vector.shape_cast %744 : vector<1x1x256xf32> to vector<1x256xf32>
    %746 = vector.broadcast %743 : f32 to vector<1x256xf32>
    %747 = arith.mulf %746, %745 : vector<1x256xf32>
    %748 = arith.addf %742, %747 : vector<1x256xf32>
    %c97_332 = arith.constant 97 : index
    %749 = memref.load %arg2[%c97_332] : memref<98xf32, #tpu.memory_space<smem>>
    %c1_333 = arith.constant 1 : index
    %c0_334 = arith.constant 0 : index
    %c179_335 = arith.constant 179 : index
    %750 = vector.load %arg6[%c1_333, %c0_334, %c179_335] : memref<2x1x512xf32, #tpu.memory_space<vmem>>, vector<1x1x256xf32>
    %751 = vector.shape_cast %750 : vector<1x1x256xf32> to vector<1x256xf32>
    %752 = vector.broadcast %749 : f32 to vector<1x256xf32>
    %753 = arith.mulf %752, %751 : vector<1x256xf32>
    %754 = arith.addf %748, %753 : vector<1x256xf32>
    %c3_i32_336 = arith.constant 3 : i32
    %755 = vector.broadcast %c3_i32_336 : i32 to vector<1x256xi32>
    %756 = arith.addi %16, %755 : vector<1x256xi32>
    %c0_i32_337 = arith.constant 0 : i32
    %757 = vector.broadcast %c0_i32_337 : i32 to vector<1x256xi32>
    %758 = arith.cmpi sge, %756, %757 : vector<1x256xi32>
    %c3_i32_338 = arith.constant 3 : i32
    %759 = vector.broadcast %c3_i32_338 : i32 to vector<1x256xi32>
    %760 = arith.addi %16, %759 : vector<1x256xi32>
    %c16_i32_339 = arith.constant 16 : i32
    %761 = vector.broadcast %c16_i32_339 : i32 to vector<1x256xi32>
    %762 = arith.cmpi slt, %760, %761 : vector<1x256xi32>
    %763 = arith.andi %758, %762 : vector<1x256xi1>
    %cst_340 = arith.constant 0.000000e+00 : f32
    %764 = vector.broadcast %cst_340 : f32 to vector<1x256xf32>
    %765 = arith.select %763, %754, %764 : vector<1x256xi1>, vector<1x256xf32>
    %766 = arith.addf %711, %765 : vector<1x256xf32>
    %767 = arith.negf %766 : vector<1x256xf32>
    %768 = math.exp %767 : vector<1x256xf32>
    %cst_341 = arith.constant 1.000000e+00 : f32
    %769 = vector.broadcast %cst_341 : f32 to vector<1x256xf32>
    %770 = arith.addf %769, %768 : vector<1x256xf32>
    %771 = arith.divf %769, %770 : vector<1x256xf32>
    %772 = vector.broadcast %771 : vector<1x256xf32> to vector<4x256xf32>
    %773 = arith.mulf %1, %772 : vector<4x256xf32>
    %c0_342 = arith.constant 0 : index
    %c0_343 = arith.constant 0 : index
    %c0_344 = arith.constant 0 : index
    %774 = vector.load %arg5[%c0_342, %c0_343, %c0_344] : memref<1x4x256xf32, #tpu.memory_space<vmem>>, vector<1x4x256xf32>
    %775 = vector.shape_cast %774 : vector<1x4x256xf32> to vector<4x256xf32>
    %776 = vector.shape_cast %773 : vector<4x256xf32> to vector<1x4x256xf32>
    tpu.vector_store %arg5[%c0_342, %c0_343, %c0_344], %776 {strides = array<i32>} : memref<1x4x256xf32, #tpu.memory_space<vmem>>, vector<1x4x256xf32>,
    return
  }
  func.func @transform_0(%arg0: i32) -> (i32, i32, i32) {
    %c0_i32 = arith.constant 0 : i32
    %c0_i32_0 = arith.constant 0 : i32
    %c0_i32_1 = arith.constant 0 : i32
    return %arg0, %c0_i32, %c0_i32_0 : i32, i32, i32
  }
  func.func @transform_1(%arg0: i32) -> i32 {
    %c0_i32 = arith.constant 0 : i32
    %c0_i32_0 = arith.constant 0 : i32
    return %c0_i32 : i32
  }
  func.func @transform_2(%arg0: i32) -> i32 {
    %c0_i32 = arith.constant 0 : i32
    %c0_i32_0 = arith.constant 0 : i32
    return %c0_i32 : i32
  }
  func.func @transform_3(%arg0: i32) -> (i32, i32) {
    %c0_i32 = arith.constant 0 : i32
    %c0_i32_0 = arith.constant 0 : i32
    %c0_i32_1 = arith.constant 0 : i32
    return %c0_i32, %c0_i32_0 : i32, i32
  }
  func.func @transform_4(%arg0: i32) -> (i32, i32, i32) {
    %c0_i32 = arith.constant 0 : i32
    %c0_i32_0 = arith.constant 0 : i32
    %c0_i32_1 = arith.constant 0 : i32
    return %arg0, %c0_i32, %c0_i32_0 : i32, i32, i32
  }
}

</mosaic_0001>

<llo_original>
// kernel: tile.9
$region0: #{tile.9}
  %s0 = inlined_call_operand.vmem [shape: s32[16,16], index: 0, kind: input, shape index: {}]
  %s1 = inlined_call_operand.vmem [shape: s32[1,256], index: 1, kind: output, shape index: {}]
  $region1: #{tile.9} parent=0
    #allocation0 [shape = 'u8[8192]{0}', space=vmem, size = 0x2000, scoped, tag = 'scoped mem for output reshape']
    %s2 = smov 3
    %v3 = vld [vmem:[%s0] ss:$8 sm:%s2]
    %vm4 = vcmask 130048
    %5 = vst.msk [vmem:[#allocation0] ss:$8 sm:$0x3] %vm4, %v3
    %s6 = scalar_lea.vmem %s0, 7
    %s7 = smov 3
    %v8 = vld [vmem:[%s6] ss:$8 sm:%s7]
    %9 = vrot.lane.b32.xlu0 %v8, 112
    %v10 = vpop.permute.xlu0 %9
    %vm11 = vcmask 1048448
    %12 = vst.msk [vmem:[#allocation0] ss:$8 sm:$0x3] %vm11, %v10
    %s13 = scalar_lea.vmem %s0, 6
    %s14 = smov 3
    %v15 = vld [vmem:[%s13] ss:$8 sm:%s14]
    %16 = vrot.lane.b32.xlu0 %v15, 96
    %v17 = vpop.permute.xlu0 %16
    %vm18 = vcmask 917248
    %19 = vst.msk [vmem:[#allocation0] ss:$8 sm:$0x3] %vm18, %v17
    %s20 = scalar_lea.vmem %s0, 5
    %s21 = smov 3
    %v22 = vld [vmem:[%s20] ss:$8 sm:%s21]
    %23 = vrot.lane.b32.xlu0 %v22, 80
    %v24 = vpop.permute.xlu0 %23
    %vm25 = vcmask 786048
    %26 = vst.msk [vmem:[#allocation0] ss:$8 sm:$0x3] %vm25, %v24
    %s27 = scalar_lea.vmem %s0, 4
    %s28 = smov 3
    %v29 = vld [vmem:[%s27] ss:$8 sm:%s28]
    %30 = vrot.lane.b32.xlu0 %v29, 64
    %v31 = vpop.permute.xlu0 %30
    %vm32 = vcmask 654848
    %33 = vst.msk [vmem:[#allocation0] ss:$8 sm:$0x3] %vm32, %v31
    %s34 = scalar_lea.vmem %s0, 3
    %s35 = smov 3
    %v36 = vld [vmem:[%s34] ss:$8 sm:%s35]
    %37 = vrot.lane.b32.xlu0 %v36, 48
    %v38 = vpop.permute.xlu0 %37
    %vm39 = vcmask 523648
    %40 = vst.msk [vmem:[#allocation0] ss:$8 sm:$0x3] %vm39, %v38
    %s41 = scalar_lea.vmem %s0, 2
    %s42 = smov 3
    %v43 = vld [vmem:[%s41] ss:$8 sm:%s42]
    %44 = vrot.lane.b32.xlu0 %v43, 32
    %v45 = vpop.permute.xlu0 %44
    %vm46 = vcmask 392448
    %47 = vst.msk [vmem:[#allocation0] ss:$8 sm:$0x3] %vm46, %v45
    %s48 = scalar_lea.vmem %s0, 1
    %s49 = smov 3
    %v50 = vld [vmem:[%s48] ss:$8 sm:%s49]
    %51 = vrot.lane.b32.xlu0 %v50, 16
    %v52 = vpop.permute.xlu0 %51
    %vm53 = vcmask 261248
    %54 = vst.msk [vmem:[#allocation0] ss:$8 sm:$0x3] %vm53, %v52
    %s56 = sshllo.u32 0, 1
    %v58 = vld [vmem:[#allocation0] sm:%s56]
    %s59 = sshllo.u32 0, 1
    %60 = vst [vmem:[%s1] sm:%s59] %v58
    %s61 = scalar_lea.vmem [#allocation0], 8
    %v62 = vld [vmem:[%s61] sm:%s56]
    %s63 = sshllo.u32 0, 1
    %s64 = scalar_lea.vmem %s1, 1
    %65 = vst [vmem:[%s64] sm:%s63] %v62

// kernel: attention_gate.1
$region0: #{attention_gate.1}
  #allocation0 [shape = 'u32[]', space=smem, size = 0x4, offset = 0x4, fixed_abs, tag = 'smem constant byte address 0x4 - core index']
  #allocation1 [shape = 'u32[144,128]{1,0:T(1,128)}', space=vmem, size = 0x12000, scoped, tag = 'internal scratch']
  #allocation2 [shape = 'f32[2,1,512]{2,1,0:T(1,128)}', space=vmem, size = 0x1000, scoped, tag = 'scratch operand']
  #allocation3 [shape = 'f32[1]{0:T(128)S(6)}', space=smem, size = 0x200, scoped, tag = 'scoped memory for attention_gate.1']
  %s0 = inlined_call_operand.vmem [shape: f32[2,4,256], index: 0, kind: input, shape index: {}]
  %s1 = inlined_call_operand.vmem [shape: f32[98], index: 1, kind: input, shape index: {}]
  %s2 = inlined_call_operand.<no memory space> [shape: f32[1], index: 2, kind: input, shape index: {}]
  %s3 = inlined_call_operand.vmem [shape: s32[1,256], index: 3, kind: input, shape index: {}]
  %s4 = inlined_call_operand.vmem [shape: f32[2,4,256], index: 4, kind: output, shape index: {}]
  %s5 = sld [smem:[#allocation0]]
  $region53: #{attention_gate.1} parent=0
    _
  %s7 = ssub.s32 1, %s5
  %s8 = scalar_select 0, %s7, %s5
  %9 = sst [smem:[#allocation3]] %s2
  $region1: #{attention_gate.1} parent=0
    #allocation4 [shape = 'u8[512]{0}', space=smem, size = 0x200, scoped, tag = 'input window, operand 1, single buffered']
    #allocation5 [shape = 's32[2]{0}', space=sflag, size = 0x8, scoped, tag = 'scoped memory for attention_gate.1']
    %10 = vsyncpa [#allocation5], 0
    loop: start=0, step=1, limit=4
    $region2: #{attention_gate.1} parent=1 // loop_pre_header
      _
    $region3: #{attention_gate.1} parent=1 // loop_header
      %s12 = sphi 0, %s16
      %p13 = scmp.ge.s32.totalorder %s12, 4
      %s22 = sphi 0, %s24
      %s25 = sphi 0, %s22
      %s26 = sphi 0, %s25
      %s42 = sphi 0, %s26
      %s46 = sphi 0, %s46
      %s48 = sphi 0, %s46
      %s49 = sphi 0, %s48
      %s63 = sphi 0, %s49
      %s67 = sphi 0, %s67
      %s69 = sphi 0, %s67
      %s70 = sphi 0, %s69
      %s84 = sphi 0, %s70
      %s88 = sphi 0, %s88
      %s90 = sphi 0, %s88
      %s91 = sphi 0, %s90
      %s105 = sphi 0, %s91
      %s111 = sphi 0, %s113
      %s114 = sphi 0, %s111
      %s115 = sphi 0, %s114
      %s131 = sphi 0, %s115
    $region4: #{attention_gate.1} parent=1 // loop_header_branch
      %15 = sbr.rel (%p13) target = $region8
    $region5: #{attention_gate.1} parent=1 // loop_body
      %s17 = ssub.s32 %s12, 1
      %s18 = ssub.s32 %s12, 2
      %s19 = sadd.s32 %s12, 1
      %s20 = ssub.s32 %s12, %s19
      %p21 = scmp.eq.s32.totalorder %s20, 0
      %s23 = sadd.s32 %s22, 1
      %s24 = scalar_select %p21, %s22, %s23
      %p27 = pneg %p21
      %p28 = scmp.eq.s32.totalorder %s12, 1
      %p29 = por %p27, %p28
      %p30 = scmp.ne.s32.totalorder %s22, %s25
      %p31 = scmp.eq.s32.totalorder %s12, 0
      %p32 = por %p30, %p31
      %p33 = scmp.ne.s32.totalorder %s22, %s25
      %p34 = scmp.eq.s32.totalorder %s17, 1
      %p35 = por %p33, %p34
      %p36 = scmp.ne.s32.totalorder %s25, %s26
      %p37 = scmp.eq.s32.totalorder %s17, 0
      %p38 = por %p36, %p37
      %p39 = scmp.ne.s32.totalorder %s25, %s26
      %p40 = scmp.eq.s32.totalorder %s18, 1
      %p41 = por %p39, %p40
      %p43 = scmp.ne.s32.totalorder %s26, %s42
      %p44 = scmp.eq.s32.totalorder %s18, 0
      %p45 = por %p43, %p44
      %s47 = sadd.s32 %s46, 1
      %p50 = scmp.eq.s32.totalorder %s12, 1
      %p51 = scmp.ne.s32.totalorder %s46, %s48
      %p52 = scmp.eq.s32.totalorder %s12, 0
      %p53 = por %p51, %p52
      %p54 = scmp.ne.s32.totalorder %s46, %s48
      %p55 = scmp.eq.s32.totalorder %s17, 1
      %p56 = por %p54, %p55
      %p57 = scmp.ne.s32.totalorder %s48, %s49
      %p58 = scmp.eq.s32.totalorder %s17, 0
      %p59 = por %p57, %p58
      %p60 = scmp.ne.s32.totalorder %s48, %s49
      %p61 = scmp.eq.s32.totalorder %s18, 1
      %p62 = por %p60, %p61
      %p64 = scmp.ne.s32.totalorder %s49, %s63
      %p65 = scmp.eq.s32.totalorder %s18, 0
      %p66 = por %p64, %p65
      %s68 = sadd.s32 %s67, 1
      %p71 = scmp.eq.s32.totalorder %s12, 1
      %p72 = scmp.ne.s32.totalorder %s67, %s69
      %p73 = scmp.eq.s32.totalorder %s12, 0
      %p74 = por %p72, %p73
      %p75 = scmp.ne.s32.totalorder %s67, %s69
      %p76 = scmp.eq.s32.totalorder %s17, 1
      %p77 = por %p75, %p76
      %p78 = scmp.ne.s32.totalorder %s69, %s70
      %p79 = scmp.eq.s32.totalorder %s17, 0
      %p80 = por %p78, %p79
      %p81 = scmp.ne.s32.totalorder %s69, %s70
      %p82 = scmp.eq.s32.totalorder %s18, 1
      %p83 = por %p81, %p82
      %p85 = scmp.ne.s32.totalorder %s70, %s84
      %p86 = scmp.eq.s32.totalorder %s18, 0
      %p87 = por %p85, %p86
      %s89 = sadd.s32 %s88, 1
      %p92 = scmp.eq.s32.totalorder %s12, 1
      %p93 = scmp.ne.s32.totalorder %s88, %s90
      %p94 = scmp.eq.s32.totalorder %s12, 0
      %p95 = por %p93, %p94
      %p96 = scmp.ne.s32.totalorder %s88, %s90
      %p97 = scmp.eq.s32.totalorder %s17, 1
      %p98 = por %p96, %p97
      %p99 = scmp.ne.s32.totalorder %s90, %s91
      %p100 = scmp.eq.s32.totalorder %s17, 0
      %p101 = por %p99, %p100
      %p102 = scmp.ne.s32.totalorder %s90, %s91
      %p103 = scmp.eq.s32.totalorder %s18, 1
      %p104 = por %p102, %p103
      %p106 = scmp.ne.s32.totalorder %s91, %s105
      %p107 = scmp.eq.s32.totalorder %s18, 0
      %p108 = por %p106, %p107
      %s109 = ssub.s32 %s12, %s19
      %p110 = scmp.eq.s32.totalorder %s109, 0
      %s112 = sadd.s32 %s111, 1
      %s113 = scalar_select %p110, %s111, %s112
      %p116 = pneg %p110
      %p117 = scmp.eq.s32.totalorder %s12, 1
      %p118 = por %p116, %p117
      %p119 = scmp.ne.s32.totalorder %s111, %s114
      %p120 = scmp.eq.s32.totalorder %s12, 0
      %p121 = por %p119, %p120
      %p122 = scmp.ne.s32.totalorder %s111, %s114
      %p123 = scmp.eq.s32.totalorder %s17, 1
      %p124 = por %p122, %p123
      %p125 = scmp.ne.s32.totalorder %s114, %s115
      %p126 = scmp.eq.s32.totalorder %s17, 0
      %p127 = por %p125, %p126
      %p128 = scmp.ne.s32.totalorder %s114, %s115
      %p129 = scmp.eq.s32.totalorder %s18, 1
      %p130 = por %p128, %p129
      %p132 = scmp.ne.s32.totalorder %s115, %s131
      %p133 = scmp.eq.s32.totalorder %s18, 0
      %p134 = por %p132, %p133
      %p135 = scmp.le.s32.totalorder 1, %s12
      %p136 = scmp.lt.s32.totalorder %s12, 3
      %p137 = pnand %p135, %p136
      %p138 = pneg %p137
      // Predicated region
      $region9: #{attention_gate.1} parent=5 // pred_check
        _
      $region10: #{attention_gate.1} parent=5 // pred_check_branch
        %140 = sbr.rel (%p137) target = $region12
      $region11: #{attention_gate.1} parent=5 // pred_region
        %s141 = ssub.s32 %s12, 1
        // Predicated region
        $region13: #{attention_gate.1} parent=11 // pred_check
          %p142 = pneg %p59
        $region14: #{attention_gate.1} parent=11 // pred_check_branch
          %144 = sbr.rel (%p142) target = $region16
        $region15: #{attention_gate.1} parent=11 // pred_region
          %s146 = ssub.s32 16, 16
          %147 = vsyncadd [#allocation5], %s146
          %s149 = sshll.u32 %s1, 4
          %s150 = int_to_ptr.vmem [resolvable:$true] %s149
          %152 = dma.vmem_to_smem %s150, 16, [#allocation4], [#allocation5]
        $region16: #{attention_gate.1} parent=11 // pred_fallthru
          _
        // Predicated region
        $region17: #{attention_gate.1} parent=11 // pred_check
          %p153 = pneg %p80
        $region18: #{attention_gate.1} parent=11 // pred_check_branch
          %155 = sbr.rel (%p153) target = $region20
        $region19: #{attention_gate.1} parent=11 // pred_region
          _
        $region20: #{attention_gate.1} parent=11 // pred_fallthru
          _
        // Predicated region
        $region21: #{attention_gate.1} parent=11 // pred_check
          %p156 = pneg %p101
        $region22: #{attention_gate.1} parent=11 // pred_check_branch
          %158 = sbr.rel (%p156) target = $region24
        $region23: #{attention_gate.1} parent=11 // pred_region
          _
        $region24: #{attention_gate.1} parent=11 // pred_fallthru
          _
      $region12: #{attention_gate.1} parent=5 // pred_fallthru
        _
      %p159 = scmp.lt.s32.totalorder %s12, 2
      // Predicated region
      $region25: #{attention_gate.1} parent=5 // pred_check
        %p160 = pneg %p159
      $region26: #{attention_gate.1} parent=5 // pred_check_branch
        %162 = sbr.rel (%p160) target = $region28
      $region27: #{attention_gate.1} parent=5 // pred_region
        // Predicated region
        $region29: #{attention_gate.1} parent=27 // pred_check
          %p163 = pneg %p32
        $region30: #{attention_gate.1} parent=27 // pred_check_branch
          %165 = sbr.rel (%p163) target = $region32
        $region31: #{attention_gate.1} parent=27 // pred_region
          %p166 = scmp.lt.s32.totalorder %s12, 1
          %s167 = scalar_select %p166, %s12, 1
          %s168 = smul.addr %s167, 2
          %s169 = smul.addr %s168, 4
          %s170 = scalar_lea.vmem %s0, %s169
        $region32: #{attention_gate.1} parent=27 // pred_fallthru
          _
      $region28: #{attention_gate.1} parent=5 // pred_fallthru
        _
      %p171 = scmp.le.s32.totalorder 1, %s12
      %p172 = scmp.lt.s32.totalorder %s12, 3
      %p173 = pnand %p171, %p172
      %p174 = pneg %p173
      // Predicated region
      $region33: #{attention_gate.1} parent=5 // pred_check
        _
      $region34: #{attention_gate.1} parent=5 // pred_check_branch
        %176 = sbr.rel (%p173) target = $region36
      $region35: #{attention_gate.1} parent=5 // pred_region
        %s177 = ssub.s32 %s12, 1
        // Predicated region
        $region37: #{attention_gate.1} parent=35 // pred_check
          %p178 = pneg %p59
        $region38: #{attention_gate.1} parent=35 // pred_check_branch
          %180 = sbr.rel (%p178) target = $region40
        $region39: #{attention_gate.1} parent=35 // pred_region
          %181 = dma.done [#allocation5], 16
        $region40: #{attention_gate.1} parent=35 // pred_fallthru
          _
        %182 = sfence
        %p183 = scmp.lt.s32.totalorder %s17, 1
        %s184 = scalar_select %p183, %s17, 1
        %s185 = smul.addr %s184, 2
        %s186 = smul.addr %s185, 4
        %s187 = scalar_lea.vmem %s0, %s186
        %p188 = pneg %p38
        %p189 = pneg %p35
        %p190 = pneg %p59
        %p191 = pneg %p56
        %p192 = pneg %p80
        %p193 = pneg %p77
        %p194 = pneg %p101
        %p195 = pneg %p98
        %p196 = pneg %p127
        %p197 = pneg %p124
        %p198 = scmp.lt.s32.totalorder %s17, 1
        %s199 = scalar_select %p198, %s17, 1
        %s200 = smul.addr %s199, 2
        %s201 = smul.addr %s200, 4
        %s202 = scalar_lea.vmem %s4, %s201
        %p203 = scmp.lt.s32.totalorder %s17, 1
        %s204 = scalar_select %p203, %s17, 1
        %s205 = smul.addr %s204, 2
        %s206 = smul.addr %s205, 4
        %s207 = scalar_lea.vmem %s0, %s206
        %p208 = scmp.lt.s32.totalorder %s17, 1
        %s209 = scalar_select %p208, %s17, 1
        %s210 = smul.addr %s209, 2
        %s211 = smul.addr %s210, 4
        %s212 = scalar_lea.vmem %s4, %s211
        %v213 = vld [vmem:[%s207] sm:$0xff]
        %v215 = vcombine.high %v213, %v213
        %vm217 = vcmask 1043456
        %v218 = vsel %vm217, %v213, -inf
        %v219 = vrot.slane %v218, 4
        %v220 = vmax.f32 %v218, %v219
        %v221 = vrot.slane %v220, 2
        %v222 = vmax.f32 %v220, %v221
        %v223 = vrot.slane %v222, 1
        %v224 = vmax.f32 %v222, %v223
        %v225 = vsel %vm217, %v215, -inf
        %v226 = vrot.slane %v225, 4
        %v227 = vmax.f32 %v225, %v226
        %v228 = vrot.slane %v227, 2
        %v229 = vmax.f32 %v227, %v228
        %v230 = vrot.slane %v229, 1
        %v231 = vmax.f32 %v229, %v230
        %v232 = vsel %vm217, %v213, 0.0
        %v233 = vrot.slane %v232, 4
        %v234 = vadd.f32 %v232, %v233
        %v235 = vrot.slane %v234, 2
        %v236 = vadd.f32 %v234, %v235
        %v237 = vrot.slane %v236, 1
        %v238 = vadd.f32 %v236, %v237
        %v239 = vsel %vm217, %v215, 0.0
        %v240 = vrot.slane %v239, 4
        %v241 = vadd.f32 %v239, %v240
        %v242 = vrot.slane %v241, 2
        %v243 = vadd.f32 %v241, %v242
        %v244 = vrot.slane %v243, 1
        %v245 = vadd.f32 %v243, %v244
        %v246 = vrcp.pop 4.0
        %v247 = vmul.f32 %v238, %v246
        %v248 = vmul.f32 %v245, %v246
        %v249 = vlaneseq
        %vm250 = vcmp.ge.s32.totalorder %v249, 0
        %vm251 = vcmp.lt.s32.totalorder %v249, 512
        %vm252 = vmand %vm250, %vm251
        %253 = vst.msk [vmem:[#allocation2] sm:$0xf] %vm252, 0.0
        %254 = vst.msk [vmem:[#allocation2 + $0x4] sm:$0xf] %vm252, 0.0
        %v257 = vcombine.low %v224, %v231
        %v259 = vunpack.c.l.s4 1966171168
        %v260 = vunpack.c.0.s8 %v259
        %v261 = vlaneseq
        %v262 = vshrl.u32 %v261, 7
        %v263 = vsub.s32 %v260, %v262
        %v264 = vrot.slane %v257, %v263
        %v266 = vunpack.c.l.s4 1966171168
        %v267 = vunpack.c.0.s8 %v266
        %v268 = vlaneseq
        %v269 = vshrl.u32 %v268, 7
        %v270 = vsub.s32 %v267, %v269
        %v271 = vrot.slane %v264, %v270
        %vm273 = vcmp.lt.s32.totalorder %v249, 256
        %vm274 = vmand %vm250, %vm273
        %275 = vst.msk [vmem:[#allocation2 + $0x1] sm:$0x3] %vm274, %v271
        %v278 = vcombine.low %v247, %v248
        %v280 = vunpack.c.l.s4 1966171168
        %v281 = vunpack.c.0.s8 %v280
        %v282 = vlaneseq
        %v283 = vshrl.u32 %v282, 7
        %v284 = vsub.s32 %v281, %v283
        %v285 = vrot.slane %v278, %v284
        %v287 = vunpack.c.l.s4 1966171168
        %v288 = vunpack.c.0.s8 %v287
        %v289 = vlaneseq
        %v290 = vshrl.u32 %v289, 7
        %v291 = vsub.s32 %v288, %v290
        %v292 = vrot.slane %v285, %v291
        %s294 = scalar_lea.vmem [#allocation2], 4
        %295 = vst.msk [vmem:[%s294 + $0x1] sm:$0x3] %vm274, %v292
        %v296 = vld [vmem:[%s3] sm:$0x3]
        %s297 = sld [smem:[#allocation3]]
        %v298 = vstv %s297
        %s299 = sld [smem:[#allocation4]]
        %v300 = vld [vmem:[#allocation2] sm:$0x7]
        %v301 = vstv %s299
        %v302 = vmul.f32 %v301, %v300
        %v303 = vadd.f32 %v302, 0.0
        %s304 = sld [smem:[#allocation4 + $0x7]]
        %v305 = vstv %s304
        %v306 = vmul.f32 %v305, %v300
        %308 = vrot.lane.b32.xlu0 %v306, 112
        %v309 = vpop.permute.xlu0 %308
        %v310 = vrot.slane %v309, 1
        %vm311 = vcmask 916480
        %v312 = vsel %vm311, %v309, %v310
        %v314 = vadd.f32 %v303, %v312
        %s315 = sld [smem:[#allocation4 + $0xe]]
        %v316 = vstv %s315
        %v317 = vmul.f32 %v316, %v300
        %319 = vrot.lane.b32.xlu0 %v317, 96
        %v320 = vpop.permute.xlu0 %319
        %v321 = vrot.slane %v320, 1
        %vm322 = vcmask 785408
        %v323 = vsel %vm322, %v320, %v321
        %v325 = vadd.f32 %v314, %v323
        %s326 = sld [smem:[#allocation4 + $0x15]]
        %v327 = vstv %s326
        %v328 = vmul.f32 %v327, %v300
        %330 = vrot.lane.b32.xlu0 %v328, 80
        %v331 = vpop.permute.xlu0 %330
        %v332 = vrot.slane %v331, 1
        %vm333 = vcmask 654336
        %v334 = vsel %vm333, %v331, %v332
        %v336 = vadd.f32 %v325, %v334
        %s337 = sld [smem:[#allocation4 + $0x1c]]
        %v338 = vld [vmem:[#allocation2 + $0x1] sm:$0x7]
        %v339 = vstv %s337
        %v340 = vmul.f32 %v339, %v338
        %342 = vrot.lane.b32.xlu0 %v340, 64
        %v343 = vpop.permute.xlu0 %342
        %v344 = vrot.slane %v343, 7
        %vm345 = vcmask 523264
        %v346 = vsel %vm345, %v344, %v343
        %v348 = vadd.f32 %v336, %v346
        %s349 = sld [smem:[#allocation4 + $0x23]]
        %v350 = vstv %s349
        %v351 = vmul.f32 %v350, %v338
        %353 = vrot.lane.b32.xlu0 %v351, 48
        %v354 = vpop.permute.xlu0 %353
        %v355 = vrot.slane %v354, 7
        %vm356 = vcmask 392192
        %v357 = vsel %vm356, %v355, %v354
        %v359 = vadd.f32 %v348, %v357
        %s360 = sld [smem:[#allocation4 + $0x2a]]
        %v361 = vstv %s360
        %v362 = vmul.f32 %v361, %v338
        %364 = vrot.lane.b32.xlu0 %v362, 32
        %v365 = vpop.permute.xlu0 %364
        %v366 = vrot.slane %v365, 7
        %vm367 = vcmask 261120
        %v368 = vsel %vm367, %v366, %v365
        %v370 = vadd.f32 %v359, %v368
        %v371 = vadd.s32 %v296, 4294967293
        %vm372 = vcmp.ge.s32.totalorder %v371, 0
        %vm373 = vcmp.lt.s32.totalorder %v371, 16
        %vm374 = vmand %vm372, %vm373
        %376 = vrot.lane.b32.xlu0 %v370, 51
        %v377 = vpop.permute.xlu0 %376
        %v378 = vrot.slane %v377, 1
        %vm379 = vcmask 416768
        %v380 = vsel %vm379, %v377, %v378
        %v382 = vsel %vm374, %v380, 0.0
        %v383 = vadd.f32 %v298, %v382
        %s384 = sld [smem:[#allocation4 + $0x1]]
        %v385 = vstv %s384
        %v386 = vmul.f32 %v385, %v300
        %v387 = vadd.f32 %v386, 0.0
        %s388 = sld [smem:[#allocation4 + $0x8]]
        %v389 = vstv %s388
        %v390 = vmul.f32 %v389, %v300
        %392 = vrot.lane.b32.xlu0 %v390, 112
        %v393 = vpop.permute.xlu0 %392
        %v394 = vrot.slane %v393, 1
        %v395 = vsel %vm311, %v393, %v394
        %v397 = vadd.f32 %v387, %v395
        %s398 = sld [smem:[#allocation4 + $0xf]]
        %v399 = vstv %s398
        %v400 = vmul.f32 %v399, %v300
        %402 = vrot.lane.b32.xlu0 %v400, 96
        %v403 = vpop.permute.xlu0 %402
        %v404 = vrot.slane %v403, 1
        %v405 = vsel %vm322, %v403, %v404
        %v407 = vadd.f32 %v397, %v405
        %s408 = sld [smem:[#allocation4 + $0x16]]
        %v409 = vstv %s408
        %v410 = vmul.f32 %v409, %v300
        %412 = vrot.lane.b32.xlu0 %v410, 80
        %v413 = vpop.permute.xlu0 %412
        %v414 = vrot.slane %v413, 1
        %v415 = vsel %vm333, %v413, %v414
        %v417 = vadd.f32 %v407, %v415
        %s418 = sld [smem:[#allocation4 + $0x1d]]
        %v419 = vstv %s418
        %v420 = vmul.f32 %v419, %v338
        %422 = vrot.lane.b32.xlu0 %v420, 64
        %v423 = vpop.permute.xlu0 %422
        %v424 = vrot.slane %v423, 7
        %v425 = vsel %vm345, %v424, %v423
        %v427 = vadd.f32 %v417, %v425
        %s428 = sld [smem:[#allocation4 + $0x24]]
        %v429 = vstv %s428
        %v430 = vmul.f32 %v429, %v338
        %432 = vrot.lane.b32.xlu0 %v430, 48
        %v433 = vpop.permute.xlu0 %432
        %v434 = vrot.slane %v433, 7
        %v435 = vsel %vm356, %v434, %v433
        %v437 = vadd.f32 %v427, %v435
        %s438 = sld [smem:[#allocation4 + $0x2b]]
        %v439 = vstv %s438
        %v440 = vmul.f32 %v439, %v338
        %442 = vrot.lane.b32.xlu0 %v440, 32
        %v443 = vpop.permute.xlu0 %442
        %v444 = vrot.slane %v443, 7
        %v445 = vsel %vm367, %v444, %v443
        %v447 = vadd.f32 %v437, %v445
        %v448 = vadd.s32 %v296, 4294967294
        %vm449 = vcmp.ge.s32.totalorder %v448, 0
        %vm450 = vcmp.lt.s32.totalorder %v448, 16
        %vm451 = vmand %vm449, %vm450
        %453 = vrot.lane.b32.xlu0 %v447, 50
        %v454 = vpop.permute.xlu0 %453
        %v455 = vrot.slane %v454, 1
        %vm456 = vcmask 408576
        %v457 = vsel %vm456, %v454, %v455
        %v459 = vsel %vm451, %v457, 0.0
        %v460 = vadd.f32 %v383, %v459
        %s461 = sld [smem:[#allocation4 + $0x2]]
        %v462 = vstv %s461
        %v463 = vmul.f32 %v462, %v300
        %v464 = vadd.f32 %v463, 0.0
        %s465 = sld [smem:[#allocation4 + $0x9]]
        %v466 = vstv %s465
        %v467 = vmul.f32 %v466, %v300
        %469 = vrot.lane.b32.xlu0 %v467, 112
        %v470 = vpop.permute.xlu0 %469
        %v471 = vrot.slane %v470, 1
        %v472 = vsel %vm311, %v470, %v471
        %v474 = vadd.f32 %v464, %v472
        %s475 = sld [smem:[#allocation4 + $0x10]]
        %v476 = vstv %s475
        %v477 = vmul.f32 %v476, %v300
        %479 = vrot.lane.b32.xlu0 %v477, 96
        %v480 = vpop.permute.xlu0 %479
        %v481 = vrot.slane %v480, 1
        %v482 = vsel %vm322, %v480, %v481
        %v484 = vadd.f32 %v474, %v482
        %s485 = sld [smem:[#allocation4 + $0x17]]
        %v486 = vstv %s485
        %v487 = vmul.f32 %v486, %v300
        %489 = vrot.lane.b32.xlu0 %v487, 80
        %v490 = vpop.permute.xlu0 %489
        %v491 = vrot.slane %v490, 1
        %v492 = vsel %vm333, %v490, %v491
        %v494 = vadd.f32 %v484, %v492
        %s495 = sld [smem:[#allocation4 + $0x1e]]
        %v496 = vstv %s495
        %v497 = vmul.f32 %v496, %v338
        %499 = vrot.lane.b32.xlu0 %v497, 64
        %v500 = vpop.permute.xlu0 %499
        %v501 = vrot.slane %v500, 7
        %v502 = vsel %vm345, %v501, %v500
        %v504 = vadd.f32 %v494, %v502
        %s505 = sld [smem:[#allocation4 + $0x25]]
        %v506 = vstv %s505
        %v507 = vmul.f32 %v506, %v338
        %509 = vrot.lane.b32.xlu0 %v507, 48
        %v510 = vpop.permute.xlu0 %509
        %v511 = vrot.slane %v510, 7
        %v512 = vsel %vm356, %v511, %v510
        %v514 = vadd.f32 %v504, %v512
        %s515 = sld [smem:[#allocation4 + $0x2c]]
        %v516 = vstv %s515
        %v517 = vmul.f32 %v516, %v338
        %519 = vrot.lane.b32.xlu0 %v517, 32
        %v520 = vpop.permute.xlu0 %519
        %v521 = vrot.slane %v520, 7
        %v522 = vsel %vm367, %v521, %v520
        %v524 = vadd.f32 %v514, %v522
        %v525 = vadd.s32 %v296, 4294967295
        %vm526 = vcmp.ge.s32.totalorder %v525, 0
        %vm527 = vcmp.lt.s32.totalorder %v525, 16
        %vm528 = vmand %vm526, %vm527
        %530 = vrot.lane.b32.xlu0 %v524, 49
        %v531 = vpop.permute.xlu0 %530
        %v532 = vrot.slane %v531, 1
        %vm533 = vcmask 400384
        %v534 = vsel %vm533, %v531, %v532
        %v536 = vsel %vm528, %v534, 0.0
        %v537 = vadd.f32 %v460, %v536
        %s538 = sld [smem:[#allocation4 + $0x3]]
        %v539 = vstv %s538
        %v540 = vmul.f32 %v539, %v300
        %v541 = vadd.f32 %v540, 0.0
        %s542 = sld [smem:[#allocation4 + $0xa]]
        %v543 = vstv %s542
        %v544 = vmul.f32 %v543, %v300
        %546 = vrot.lane.b32.xlu0 %v544, 112
        %v547 = vpop.permute.xlu0 %546
        %v548 = vrot.slane %v547, 1
        %v549 = vsel %vm311, %v547, %v548
        %v551 = vadd.f32 %v541, %v549
        %s552 = sld [smem:[#allocation4 + $0x11]]
        %v553 = vstv %s552
        %v554 = vmul.f32 %v553, %v300
        %556 = vrot.lane.b32.xlu0 %v554, 96
        %v557 = vpop.permute.xlu0 %556
        %v558 = vrot.slane %v557, 1
        %v559 = vsel %vm322, %v557, %v558
        %v561 = vadd.f32 %v551, %v559
        %s562 = sld [smem:[#allocation4 + $0x18]]
        %v563 = vld [vmem:[#allocation2 + $0x1] sm:$0x3]
        %v564 = vstv %s562
        %v565 = vmul.f32 %v564, %v563
        %567 = vrot.lane.b32.xlu0 %v565, 80
        %v568 = vpop.permute.xlu0 %567
        %v569 = vrot.slane %v568, 7
        %v570 = vsel %vm333, %v569, %v568
        %v572 = vadd.f32 %v561, %v570
        %s573 = sld [smem:[#allocation4 + $0x1f]]
        %v574 = vstv %s573
        %v575 = vmul.f32 %v574, %v338
        %577 = vrot.lane.b32.xlu0 %v575, 64
        %v578 = vpop.permute.xlu0 %577
        %v579 = vrot.slane %v578, 7
        %v580 = vsel %vm345, %v579, %v578
        %v582 = vadd.f32 %v572, %v580
        %s583 = sld [smem:[#allocation4 + $0x26]]
        %v584 = vstv %s583
        %v585 = vmul.f32 %v584, %v338
        %587 = vrot.lane.b32.xlu0 %v585, 48
        %v588 = vpop.permute.xlu0 %587
        %v589 = vrot.slane %v588, 7
        %v590 = vsel %vm356, %v589, %v588
        %v592 = vadd.f32 %v582, %v590
        %s593 = sld [smem:[#allocation4 + $0x2d]]
        %v594 = vstv %s593
        %v595 = vmul.f32 %v594, %v338
        %597 = vrot.lane.b32.xlu0 %v595, 32
        %v598 = vpop.permute.xlu0 %597
        %v599 = vrot.slane %v598, 7
        %v600 = vsel %vm367, %v599, %v598
        %v602 = vadd.f32 %v592, %v600
        %604 = vrot.lane.b32.xlu0 %v602, 48
        %v605 = vpop.permute.xlu0 %604
        %v606 = vrot.slane %v605, 1
        %v607 = vsel %vm356, %v605, %v606
        %v609 = vadd.f32 %v537, %v607
        %s610 = sld [smem:[#allocation4 + $0x4]]
        %v611 = vstv %s610
        %v612 = vmul.f32 %v611, %v300
        %v613 = vadd.f32 %v612, 0.0
        %s614 = sld [smem:[#allocation4 + $0xb]]
        %v615 = vstv %s614
        %v616 = vmul.f32 %v615, %v300
        %618 = vrot.lane.b32.xlu0 %v616, 112
        %v619 = vpop.permute.xlu0 %618
        %v620 = vrot.slane %v619, 1
        %v621 = vsel %vm311, %v619, %v620
        %v623 = vadd.f32 %v613, %v621
        %s624 = sld [smem:[#allocation4 + $0x12]]
        %v625 = vstv %s624
        %v626 = vmul.f32 %v625, %v300
        %628 = vrot.lane.b32.xlu0 %v626, 96
        %v629 = vpop.permute.xlu0 %628
        %v630 = vrot.slane %v629, 1
        %v631 = vsel %vm322, %v629, %v630
        %v633 = vadd.f32 %v623, %v631
        %s634 = sld [smem:[#allocation4 + $0x19]]
        %v635 = vstv %s634
        %v636 = vmul.f32 %v635, %v338
        %638 = vrot.lane.b32.xlu0 %v636, 80
        %v639 = vpop.permute.xlu0 %638
        %v640 = vrot.slane %v639, 7
        %v641 = vsel %vm333, %v640, %v639
        %v643 = vadd.f32 %v633, %v641
        %s644 = sld [smem:[#allocation4 + $0x20]]
        %v645 = vstv %s644
        %v646 = vmul.f32 %v645, %v338
        %648 = vrot.lane.b32.xlu0 %v646, 64
        %v649 = vpop.permute.xlu0 %648
        %v650 = vrot.slane %v649, 7
        %v651 = vsel %vm345, %v650, %v649
        %v653 = vadd.f32 %v643, %v651
        %s654 = sld [smem:[#allocation4 + $0x27]]
        %v655 = vstv %s654
        %v656 = vmul.f32 %v655, %v338
        %658 = vrot.lane.b32.xlu0 %v656, 48
        %v659 = vpop.permute.xlu0 %658
        %v660 = vrot.slane %v659, 7
        %v661 = vsel %vm356, %v660, %v659
        %v663 = vadd.f32 %v653, %v661
        %s664 = sld [smem:[#allocation4 + $0x2e]]
        %v665 = vstv %s664
        %v666 = vmul.f32 %v665, %v338
        %668 = vrot.lane.b32.xlu0 %v666, 32
        %v669 = vpop.permute.xlu0 %668
        %v670 = vrot.slane %v669, 7
        %v671 = vsel %vm367, %v670, %v669
        %v673 = vadd.f32 %v663, %v671
        %v674 = vadd.s32 %v296, 1
        %vm675 = vcmp.ge.s32.totalorder %v674, 0
        %vm676 = vcmp.lt.s32.totalorder %v674, 16
        %vm677 = vmand %vm675, %vm676
        %679 = vrot.lane.b32.xlu0 %v673, 47
        %v680 = vpop.permute.xlu0 %679
        %v681 = vrot.slane %v680, 1
        %vm682 = vcmask 384000
        %v683 = vsel %vm682, %v680, %v681
        %v685 = vsel %vm677, %v683, 0.0
        %v686 = vadd.f32 %v609, %v685
        %s687 = sld [smem:[#allocation4 + $0x5]]
        %v688 = vstv %s687
        %v689 = vmul.f32 %v688, %v300
        %v690 = vadd.f32 %v689, 0.0
        %s691 = sld [smem:[#allocation4 + $0xc]]
        %v692 = vstv %s691
        %v693 = vmul.f32 %v692, %v300
        %695 = vrot.lane.b32.xlu0 %v693, 112
        %v696 = vpop.permute.xlu0 %695
        %v697 = vrot.slane %v696, 1
        %v698 = vsel %vm311, %v696, %v697
        %v700 = vadd.f32 %v690, %v698
        %s701 = sld [smem:[#allocation4 + $0x13]]
        %v702 = vstv %s701
        %v703 = vmul.f32 %v702, %v300
        %705 = vrot.lane.b32.xlu0 %v703, 96
        %v706 = vpop.permute.xlu0 %705
        %v707 = vrot.slane %v706, 1
        %v708 = vsel %vm322, %v706, %v707
        %v710 = vadd.f32 %v700, %v708
        %s711 = sld [smem:[#allocation4 + $0x1a]]
        %v712 = vstv %s711
        %v713 = vmul.f32 %v712, %v338
        %715 = vrot.lane.b32.xlu0 %v713, 80
        %v716 = vpop.permute.xlu0 %715
        %v717 = vrot.slane %v716, 7
        %v718 = vsel %vm333, %v717, %v716
        %v720 = vadd.f32 %v710, %v718
        %s721 = sld [smem:[#allocation4 + $0x21]]
        %v722 = vstv %s721
        %v723 = vmul.f32 %v722, %v338
        %725 = vrot.lane.b32.xlu0 %v723, 64
        %v726 = vpop.permute.xlu0 %725
        %v727 = vrot.slane %v726, 7
        %v728 = vsel %vm345, %v727, %v726
        %v730 = vadd.f32 %v720, %v728
        %s731 = sld [smem:[#allocation4 + $0x28]]
        %v732 = vstv %s731
        %v733 = vmul.f32 %v732, %v338
        %735 = vrot.lane.b32.xlu0 %v733, 48
        %v736 = vpop.permute.xlu0 %735
        %v737 = vrot.slane %v736, 7
        %v738 = vsel %vm356, %v737, %v736
        %v740 = vadd.f32 %v730, %v738
        %s741 = sld [smem:[#allocation4 + $0x2f]]
        %v742 = vstv %s741
        %v743 = vmul.f32 %v742, %v338
        %745 = vrot.lane.b32.xlu0 %v743, 32
        %v746 = vpop.permute.xlu0 %745
        %v747 = vrot.slane %v746, 7
        %v748 = vsel %vm367, %v747, %v746
        %v750 = vadd.f32 %v740, %v748
        %v751 = vadd.s32 %v296, 2
        %vm752 = vcmp.ge.s32.totalorder %v751, 0
        %vm753 = vcmp.lt.s32.totalorder %v751, 16
        %vm754 = vmand %vm752, %vm753
        %756 = vrot.lane.b32.xlu0 %v750, 46
        %v757 = vpop.permute.xlu0 %756
        %v758 = vrot.slane %v757, 1
        %vm759 = vcmask 375808
        %v760 = vsel %vm759, %v757, %v758
        %v762 = vsel %vm754, %v760, 0.0
        %v763 = vadd.f32 %v686, %v762
        %s764 = sld [smem:[#allocation4 + $0x6]]
        %v765 = vstv %s764
        %v766 = vmul.f32 %v765, %v300
        %v767 = vadd.f32 %v766, 0.0
        %s768 = sld [smem:[#allocation4 + $0xd]]
        %v769 = vstv %s768
        %v770 = vmul.f32 %v769, %v300
        %772 = vrot.lane.b32.xlu0 %v770, 112
        %v773 = vpop.permute.xlu0 %772
        %v774 = vrot.slane %v773, 1
        %v775 = vsel %vm311, %v773, %v774
        %v777 = vadd.f32 %v767, %v775
        %s778 = sld [smem:[#allocation4 + $0x14]]
        %v779 = vstv %s778
        %v780 = vmul.f32 %v779, %v300
        %782 = vrot.lane.b32.xlu0 %v780, 96
        %v783 = vpop.permute.xlu0 %782
        %v784 = vrot.slane %v783, 1
        %v785 = vsel %vm322, %v783, %v784
        %v787 = vadd.f32 %v777, %v785
        %s788 = sld [smem:[#allocation4 + $0x1b]]
        %v789 = vstv %s788
        %v790 = vmul.f32 %v789, %v338
        %792 = vrot.lane.b32.xlu0 %v790, 80
        %v793 = vpop.permute.xlu0 %792
        %v794 = vrot.slane %v793, 7
        %v795 = vsel %vm333, %v794, %v793
        %v797 = vadd.f32 %v787, %v795
        %s798 = sld [smem:[#allocation4 + $0x22]]
        %v799 = vstv %s798
        %v800 = vmul.f32 %v799, %v338
        %802 = vrot.lane.b32.xlu0 %v800, 64
        %v803 = vpop.permute.xlu0 %802
        %v804 = vrot.slane %v803, 7
        %v805 = vsel %vm345, %v804, %v803
        %v807 = vadd.f32 %v797, %v805
        %s808 = sld [smem:[#allocation4 + $0x29]]
        %v809 = vstv %s808
        %v810 = vmul.f32 %v809, %v338
        %812 = vrot.lane.b32.xlu0 %v810, 48
        %v813 = vpop.permute.xlu0 %812
        %v814 = vrot.slane %v813, 7
        %v815 = vsel %vm356, %v814, %v813
        %v817 = vadd.f32 %v807, %v815
        %s818 = sld [smem:[#allocation4 + $0x30]]
        %v819 = vstv %s818
        %v820 = vmul.f32 %v819, %v338
        %822 = vrot.lane.b32.xlu0 %v820, 32
        %v823 = vpop.permute.xlu0 %822
        %v824 = vrot.slane %v823, 7
        %v825 = vsel %vm367, %v824, %v823
        %v827 = vadd.f32 %v817, %v825
        %v828 = vadd.s32 %v296, 3
        %vm829 = vcmp.ge.s32.totalorder %v828, 0
        %vm830 = vcmp.lt.s32.totalorder %v828, 16
        %vm831 = vmand %vm829, %vm830
        %833 = vrot.lane.b32.xlu0 %v827, 45
        %v834 = vpop.permute.xlu0 %833
        %v835 = vrot.slane %v834, 1
        %vm836 = vcmask 367616
        %v837 = vsel %vm836, %v834, %v835
        %v839 = vsel %vm831, %v837, 0.0
        %v840 = vadd.f32 %v763, %v839
        %s841 = sld [smem:[#allocation4 + $0x31]]
        %v842 = vld [vmem:[%s294] sm:$0x7]
        %v843 = vstv %s841
        %v844 = vmul.f32 %v843, %v842
        %v845 = vadd.f32 %v844, 0.0
        %s846 = sld [smem:[#allocation4 + $0x38]]
        %v847 = vstv %s846
        %v848 = vmul.f32 %v847, %v842
        %850 = vrot.lane.b32.xlu0 %v848, 112
        %v851 = vpop.permute.xlu0 %850
        %v852 = vrot.slane %v851, 1
        %v853 = vsel %vm311, %v851, %v852
        %v855 = vadd.f32 %v845, %v853
        %s856 = sld [smem:[#allocation4 + $0x3f]]
        %v857 = vstv %s856
        %v858 = vmul.f32 %v857, %v842
        %860 = vrot.lane.b32.xlu0 %v858, 96
        %v861 = vpop.permute.xlu0 %860
        %v862 = vrot.slane %v861, 1
        %v863 = vsel %vm322, %v861, %v862
        %v865 = vadd.f32 %v855, %v863
        %s866 = sld [smem:[#allocation4 + $0x46]]
        %v867 = vstv %s866
        %v868 = vmul.f32 %v867, %v842
        %870 = vrot.lane.b32.xlu0 %v868, 80
        %v871 = vpop.permute.xlu0 %870
        %v872 = vrot.slane %v871, 1
        %v873 = vsel %vm333, %v871, %v872
        %v875 = vadd.f32 %v865, %v873
        %s876 = sld [smem:[#allocation4 + $0x4d]]
        %v877 = vld [vmem:[%s294 + $0x1] sm:$0x7]
        %v878 = vstv %s876
        %v879 = vmul.f32 %v878, %v877
        %881 = vrot.lane.b32.xlu0 %v879, 64
        %v882 = vpop.permute.xlu0 %881
        %v883 = vrot.slane %v882, 7
        %v884 = vsel %vm345, %v883, %v882
        %v886 = vadd.f32 %v875, %v884
        %s887 = sld [smem:[#allocation4 + $0x54]]
        %v888 = vstv %s887
        %v889 = vmul.f32 %v888, %v877
        %891 = vrot.lane.b32.xlu0 %v889, 48
        %v892 = vpop.permute.xlu0 %891
        %v893 = vrot.slane %v892, 7
        %v894 = vsel %vm356, %v893, %v892
        %v896 = vadd.f32 %v886, %v894
        %s897 = sld [smem:[#allocation4 + $0x5b]]
        %v898 = vstv %s897
        %v899 = vmul.f32 %v898, %v877
        %901 = vrot.lane.b32.xlu0 %v899, 32
        %v902 = vpop.permute.xlu0 %901
        %v903 = vrot.slane %v902, 7
        %v904 = vsel %vm367, %v903, %v902
        %v906 = vadd.f32 %v896, %v904
        %908 = vrot.lane.b32.xlu0 %v906, 51
        %v909 = vpop.permute.xlu0 %908
        %v910 = vrot.slane %v909, 1
        %v911 = vsel %vm379, %v909, %v910
        %v913 = vsel %vm374, %v911, 0.0
        %v914 = vadd.f32 %v840, %v913
        %s915 = sld [smem:[#allocation4 + $0x32]]
        %v916 = vstv %s915
        %v917 = vmul.f32 %v916, %v842
        %v918 = vadd.f32 %v917, 0.0
        %s919 = sld [smem:[#allocation4 + $0x39]]
        %v920 = vstv %s919
        %v921 = vmul.f32 %v920, %v842
        %923 = vrot.lane.b32.xlu0 %v921, 112
        %v924 = vpop.permute.xlu0 %923
        %v925 = vrot.slane %v924, 1
        %v926 = vsel %vm311, %v924, %v925
        %v928 = vadd.f32 %v918, %v926
        %s929 = sld [smem:[#allocation4 + $0x40]]
        %v930 = vstv %s929
        %v931 = vmul.f32 %v930, %v842
        %933 = vrot.lane.b32.xlu0 %v931, 96
        %v934 = vpop.permute.xlu0 %933
        %v935 = vrot.slane %v934, 1
        %v936 = vsel %vm322, %v934, %v935
        %v938 = vadd.f32 %v928, %v936
        %s939 = sld [smem:[#allocation4 + $0x47]]
        %v940 = vstv %s939
        %v941 = vmul.f32 %v940, %v842
        %943 = vrot.lane.b32.xlu0 %v941, 80
        %v944 = vpop.permute.xlu0 %943
        %v945 = vrot.slane %v944, 1
        %v946 = vsel %vm333, %v944, %v945
        %v948 = vadd.f32 %v938, %v946
        %s949 = sld [smem:[#allocation4 + $0x4e]]
        %v950 = vstv %s949
        %v951 = vmul.f32 %v950, %v877
        %953 = vrot.lane.b32.xlu0 %v951, 64
        %v954 = vpop.permute.xlu0 %953
        %v955 = vrot.slane %v954, 7
        %v956 = vsel %vm345, %v955, %v954
        %v958 = vadd.f32 %v948, %v956
        %s959 = sld [smem:[#allocation4 + $0x55]]
        %v960 = vstv %s959
        %v961 = vmul.f32 %v960, %v877
        %963 = vrot.lane.b32.xlu0 %v961, 48
        %v964 = vpop.permute.xlu0 %963
        %v965 = vrot.slane %v964, 7
        %v966 = vsel %vm356, %v965, %v964
        %v968 = vadd.f32 %v958, %v966
        %s969 = sld [smem:[#allocation4 + $0x5c]]
        %v970 = vstv %s969
        %v971 = vmul.f32 %v970, %v877
        %973 = vrot.lane.b32.xlu0 %v971, 32
        %v974 = vpop.permute.xlu0 %973
        %v975 = vrot.slane %v974, 7
        %v976 = vsel %vm367, %v975, %v974
        %v978 = vadd.f32 %v968, %v976
        %980 = vrot.lane.b32.xlu0 %v978, 50
        %v981 = vpop.permute.xlu0 %980
        %v982 = vrot.slane %v981, 1
        %v983 = vsel %vm456, %v981, %v982
        %v985 = vsel %vm451, %v983, 0.0
        %v986 = vadd.f32 %v914, %v985
        %s987 = sld [smem:[#allocation4 + $0x33]]
        %v988 = vstv %s987
        %v989 = vmul.f32 %v988, %v842
        %v990 = vadd.f32 %v989, 0.0
        %s991 = sld [smem:[#allocation4 + $0x3a]]
        %v992 = vstv %s991
        %v993 = vmul.f32 %v992, %v842
        %995 = vrot.lane.b32.xlu0 %v993, 112
        %v996 = vpop.permute.xlu0 %995
        %v997 = vrot.slane %v996, 1
        %v998 = vsel %vm311, %v996, %v997
        %v1000 = vadd.f32 %v990, %v998
        %s1001 = sld [smem:[#allocation4 + $0x41]]
        %v1002 = vstv %s1001
        %v1003 = vmul.f32 %v1002, %v842
        %1005 = vrot.lane.b32.xlu0 %v1003, 96
        %v1006 = vpop.permute.xlu0 %1005
        %v1007 = vrot.slane %v1006, 1
        %v1008 = vsel %vm322, %v1006, %v1007
        %v1010 = vadd.f32 %v1000, %v1008
        %s1011 = sld [smem:[#allocation4 + $0x48]]
        %v1012 = vstv %s1011
        %v1013 = vmul.f32 %v1012, %v842
        %1015 = vrot.lane.b32.xlu0 %v1013, 80
        %v1016 = vpop.permute.xlu0 %1015
        %v1017 = vrot.slane %v1016, 1
        %v1018 = vsel %vm333, %v1016, %v1017
        %v1020 = vadd.f32 %v1010, %v1018
        %s1021 = sld [smem:[#allocation4 + $0x4f]]
        %v1022 = vstv %s1021
        %v1023 = vmul.f32 %v1022, %v877
        %1025 = vrot.lane.b32.xlu0 %v1023, 64
        %v1026 = vpop.permute.xlu0 %1025
        %v1027 = vrot.slane %v1026, 7
        %v1028 = vsel %vm345, %v1027, %v1026
        %v1030 = vadd.f32 %v1020, %v1028
        %s1031 = sld [smem:[#allocation4 + $0x56]]
        %v1032 = vstv %s1031
        %v1033 = vmul.f32 %v1032, %v877
        %1035 = vrot.lane.b32.xlu0 %v1033, 48
        %v1036 = vpop.permute.xlu0 %1035
        %v1037 = vrot.slane %v1036, 7
        %v1038 = vsel %vm356, %v1037, %v1036
        %v1040 = vadd.f32 %v1030, %v1038
        %s1041 = sld [smem:[#allocation4 + $0x5d]]
        %v1042 = vstv %s1041
        %v1043 = vmul.f32 %v1042, %v877
        %1045 = vrot.lane.b32.xlu0 %v1043, 32
        %v1046 = vpop.permute.xlu0 %1045
        %v1047 = vrot.slane %v1046, 7
        %v1048 = vsel %vm367, %v1047, %v1046
        %v1050 = vadd.f32 %v1040, %v1048
        %1052 = vrot.lane.b32.xlu0 %v1050, 49
        %v1053 = vpop.permute.xlu0 %1052
        %v1054 = vrot.slane %v1053, 1
        %v1055 = vsel %vm533, %v1053, %v1054
        %v1057 = vsel %vm528, %v1055, 0.0
        %v1058 = vadd.f32 %v986, %v1057
        %s1059 = sld [smem:[#allocation4 + $0x34]]
        %v1060 = vstv %s1059
        %v1061 = vmul.f32 %v1060, %v842
        %v1062 = vadd.f32 %v1061, 0.0
        %s1063 = sld [smem:[#allocation4 + $0x3b]]
        %v1064 = vstv %s1063
        %v1065 = vmul.f32 %v1064, %v842
        %1067 = vrot.lane.b32.xlu0 %v1065, 112
        %v1068 = vpop.permute.xlu0 %1067
        %v1069 = vrot.slane %v1068, 1
        %v1070 = vsel %vm311, %v1068, %v1069
        %v1072 = vadd.f32 %v1062, %v1070
        %s1073 = sld [smem:[#allocation4 + $0x42]]
        %v1074 = vstv %s1073
        %v1075 = vmul.f32 %v1074, %v842
        %1077 = vrot.lane.b32.xlu0 %v1075, 96
        %v1078 = vpop.permute.xlu0 %1077
        %v1079 = vrot.slane %v1078, 1
        %v1080 = vsel %vm322, %v1078, %v1079
        %v1082 = vadd.f32 %v1072, %v1080
        %s1083 = sld [smem:[#allocation4 + $0x49]]
        %v1084 = vld [vmem:[%s294 + $0x1] sm:$0x3]
        %v1085 = vstv %s1083
        %v1086 = vmul.f32 %v1085, %v1084
        %1088 = vrot.lane.b32.xlu0 %v1086, 80
        %v1089 = vpop.permute.xlu0 %1088
        %v1090 = vrot.slane %v1089, 7
        %v1091 = vsel %vm333, %v1090, %v1089
        %v1093 = vadd.f32 %v1082, %v1091
        %s1094 = sld [smem:[#allocation4 + $0x50]]
        %v1095 = vstv %s1094
        %v1096 = vmul.f32 %v1095, %v877
        %1098 = vrot.lane.b32.xlu0 %v1096, 64
        %v1099 = vpop.permute.xlu0 %1098
        %v1100 = vrot.slane %v1099, 7
        %v1101 = vsel %vm345, %v1100, %v1099
        %v1103 = vadd.f32 %v1093, %v1101
        %s1104 = sld [smem:[#allocation4 + $0x57]]
        %v1105 = vstv %s1104
        %v1106 = vmul.f32 %v1105, %v877
        %1108 = vrot.lane.b32.xlu0 %v1106, 48
        %v1109 = vpop.permute.xlu0 %1108
        %v1110 = vrot.slane %v1109, 7
        %v1111 = vsel %vm356, %v1110, %v1109
        %v1113 = vadd.f32 %v1103, %v1111
        %s1114 = sld [smem:[#allocation4 + $0x5e]]
        %v1115 = vstv %s1114
        %v1116 = vmul.f32 %v1115, %v877
        %1118 = vrot.lane.b32.xlu0 %v1116, 32
        %v1119 = vpop.permute.xlu0 %1118
        %v1120 = vrot.slane %v1119, 7
        %v1121 = vsel %vm367, %v1120, %v1119
        %v1123 = vadd.f32 %v1113, %v1121
        %1125 = vrot.lane.b32.xlu0 %v1123, 48
        %v1126 = vpop.permute.xlu0 %1125
        %v1127 = vrot.slane %v1126, 1
        %v1128 = vsel %vm356, %v1126, %v1127
        %v1130 = vadd.f32 %v1058, %v1128
        %s1131 = sld [smem:[#allocation4 + $0x35]]
        %v1132 = vstv %s1131
        %v1133 = vmul.f32 %v1132, %v842
        %v1134 = vadd.f32 %v1133, 0.0
        %s1135 = sld [smem:[#allocation4 + $0x3c]]
        %v1136 = vstv %s1135
        %v1137 = vmul.f32 %v1136, %v842
        %1139 = vrot.lane.b32.xlu0 %v1137, 112
        %v1140 = vpop.permute.xlu0 %1139
        %v1141 = vrot.slane %v1140, 1
        %v1142 = vsel %vm311, %v1140, %v1141
        %v1144 = vadd.f32 %v1134, %v1142
        %s1145 = sld [smem:[#allocation4 + $0x43]]
        %v1146 = vstv %s1145
        %v1147 = vmul.f32 %v1146, %v842
        %1149 = vrot.lane.b32.xlu0 %v1147, 96
        %v1150 = vpop.permute.xlu0 %1149
        %v1151 = vrot.slane %v1150, 1
        %v1152 = vsel %vm322, %v1150, %v1151
        %v1154 = vadd.f32 %v1144, %v1152
        %s1155 = sld [smem:[#allocation4 + $0x4a]]
        %v1156 = vstv %s1155
        %v1157 = vmul.f32 %v1156, %v877
        %1159 = vrot.lane.b32.xlu0 %v1157, 80
        %v1160 = vpop.permute.xlu0 %1159
        %v1161 = vrot.slane %v1160, 7
        %v1162 = vsel %vm333, %v1161, %v1160
        %v1164 = vadd.f32 %v1154, %v1162
        %s1165 = sld [smem:[#allocation4 + $0x51]]
        %v1166 = vstv %s1165
        %v1167 = vmul.f32 %v1166, %v877
        %1169 = vrot.lane.b32.xlu0 %v1167, 64
        %v1170 = vpop.permute.xlu0 %1169
        %v1171 = vrot.slane %v1170, 7
        %v1172 = vsel %vm345, %v1171, %v1170
        %v1174 = vadd.f32 %v1164, %v1172
        %s1175 = sld [smem:[#allocation4 + $0x58]]
        %v1176 = vstv %s1175
        %v1177 = vmul.f32 %v1176, %v877
        %1179 = vrot.lane.b32.xlu0 %v1177, 48
        %v1180 = vpop.permute.xlu0 %1179
        %v1181 = vrot.slane %v1180, 7
        %v1182 = vsel %vm356, %v1181, %v1180
        %v1184 = vadd.f32 %v1174, %v1182
        %s1185 = sld [smem:[#allocation4 + $0x5f]]
        %v1186 = vstv %s1185
        %v1187 = vmul.f32 %v1186, %v877
        %1189 = vrot.lane.b32.xlu0 %v1187, 32
        %v1190 = vpop.permute.xlu0 %1189
        %v1191 = vrot.slane %v1190, 7
        %v1192 = vsel %vm367, %v1191, %v1190
        %v1194 = vadd.f32 %v1184, %v1192
        %1196 = vrot.lane.b32.xlu0 %v1194, 47
        %v1197 = vpop.permute.xlu0 %1196
        %v1198 = vrot.slane %v1197, 1
        %v1199 = vsel %vm682, %v1197, %v1198
        %v1201 = vsel %vm677, %v1199, 0.0
        %v1202 = vadd.f32 %v1130, %v1201
        %s1203 = sld [smem:[#allocation4 + $0x36]]
        %v1204 = vstv %s1203
        %v1205 = vmul.f32 %v1204, %v842
        %v1206 = vadd.f32 %v1205, 0.0
        %s1207 = sld [smem:[#allocation4 + $0x3d]]
        %v1208 = vstv %s1207
        %v1209 = vmul.f32 %v1208, %v842
        %1211 = vrot.lane.b32.xlu0 %v1209, 112
        %v1212 = vpop.permute.xlu0 %1211
        %v1213 = vrot.slane %v1212, 1
        %v1214 = vsel %vm311, %v1212, %v1213
        %v1216 = vadd.f32 %v1206, %v1214
        %s1217 = sld [smem:[#allocation4 + $0x44]]
        %v1218 = vstv %s1217
        %v1219 = vmul.f32 %v1218, %v842
        %1221 = vrot.lane.b32.xlu0 %v1219, 96
        %v1222 = vpop.permute.xlu0 %1221
        %v1223 = vrot.slane %v1222, 1
        %v1224 = vsel %vm322, %v1222, %v1223
        %v1226 = vadd.f32 %v1216, %v1224
        %s1227 = sld [smem:[#allocation4 + $0x4b]]
        %v1228 = vstv %s1227
        %v1229 = vmul.f32 %v1228, %v877
        %1231 = vrot.lane.b32.xlu0 %v1229, 80
        %v1232 = vpop.permute.xlu0 %1231
        %v1233 = vrot.slane %v1232, 7
        %v1234 = vsel %vm333, %v1233, %v1232
        %v1236 = vadd.f32 %v1226, %v1234
        %s1237 = sld [smem:[#allocation4 + $0x52]]
        %v1238 = vstv %s1237
        %v1239 = vmul.f32 %v1238, %v877
        %1241 = vrot.lane.b32.xlu0 %v1239, 64
        %v1242 = vpop.permute.xlu0 %1241
        %v1243 = vrot.slane %v1242, 7
        %v1244 = vsel %vm345, %v1243, %v1242
        %v1246 = vadd.f32 %v1236, %v1244
        %s1247 = sld [smem:[#allocation4 + $0x59]]
        %v1248 = vstv %s1247
        %v1249 = vmul.f32 %v1248, %v877
        %1251 = vrot.lane.b32.xlu0 %v1249, 48
        %v1252 = vpop.permute.xlu0 %1251
        %v1253 = vrot.slane %v1252, 7
        %v1254 = vsel %vm356, %v1253, %v1252
        %v1256 = vadd.f32 %v1246, %v1254
        %s1257 = sld [smem:[#allocation4 + $0x60]]
        %v1258 = vstv %s1257
        %v1259 = vmul.f32 %v1258, %v877
        %1261 = vrot.lane.b32.xlu0 %v1259, 32
        %v1262 = vpop.permute.xlu0 %1261
        %v1263 = vrot.slane %v1262, 7
        %v1264 = vsel %vm367, %v1263, %v1262
        %v1266 = vadd.f32 %v1256, %v1264
        %1268 = vrot.lane.b32.xlu0 %v1266, 46
        %v1269 = vpop.permute.xlu0 %1268
        %v1270 = vrot.slane %v1269, 1
        %v1271 = vsel %vm759, %v1269, %v1270
        %v1273 = vsel %vm754, %v1271, 0.0
        %v1274 = vadd.f32 %v1202, %v1273
        %s1275 = sld [smem:[#allocation4 + $0x37]]
        %v1276 = vstv %s1275
        %v1277 = vmul.f32 %v1276, %v842
        %v1278 = vadd.f32 %v1277, 0.0
        %s1279 = sld [smem:[#allocation4 + $0x3e]]
        %v1280 = vstv %s1279
        %v1281 = vmul.f32 %v1280, %v842
        %1283 = vrot.lane.b32.xlu0 %v1281, 112
        %v1284 = vpop.permute.xlu0 %1283
        %v1285 = vrot.slane %v1284, 1
        %v1286 = vsel %vm311, %v1284, %v1285
        %v1288 = vadd.f32 %v1278, %v1286
        %s1289 = sld [smem:[#allocation4 + $0x45]]
        %v1290 = vstv %s1289
        %v1291 = vmul.f32 %v1290, %v842
        %1293 = vrot.lane.b32.xlu0 %v1291, 96
        %v1294 = vpop.permute.xlu0 %1293
        %v1295 = vrot.slane %v1294, 1
        %v1296 = vsel %vm322, %v1294, %v1295
        %v1298 = vadd.f32 %v1288, %v1296
        %s1299 = sld [smem:[#allocation4 + $0x4c]]
        %v1300 = vstv %s1299
        %v1301 = vmul.f32 %v1300, %v877
        %1303 = vrot.lane.b32.xlu0 %v1301, 80
        %v1304 = vpop.permute.xlu0 %1303
        %v1305 = vrot.slane %v1304, 7
        %v1306 = vsel %vm333, %v1305, %v1304
        %v1308 = vadd.f32 %v1298, %v1306
        %s1309 = sld [smem:[#allocation4 + $0x53]]
        %v1310 = vstv %s1309
        %v1311 = vmul.f32 %v1310, %v877
        %1313 = vrot.lane.b32.xlu0 %v1311, 64
        %v1314 = vpop.permute.xlu0 %1313
        %v1315 = vrot.slane %v1314, 7
        %v1316 = vsel %vm345, %v1315, %v1314
        %v1318 = vadd.f32 %v1308, %v1316
        %s1319 = sld [smem:[#allocation4 + $0x5a]]
        %v1320 = vstv %s1319
        %v1321 = vmul.f32 %v1320, %v877
        %1323 = vrot.lane.b32.xlu0 %v1321, 48
        %v1324 = vpop.permute.xlu0 %1323
        %v1325 = vrot.slane %v1324, 7
        %v1326 = vsel %vm356, %v1325, %v1324
        %v1328 = vadd.f32 %v1318, %v1326
        %s1329 = sld [smem:[#allocation4 + $0x61]]
        %v1330 = vstv %s1329
        %v1331 = vmul.f32 %v1330, %v877
        %1333 = vrot.lane.b32.xlu0 %v1331, 32
        %v1334 = vpop.permute.xlu0 %1333
        %v1335 = vrot.slane %v1334, 7
        %v1336 = vsel %vm367, %v1335, %v1334
        %v1338 = vadd.f32 %v1328, %v1336
        %1340 = vrot.lane.b32.xlu0 %v1338, 45
        %v1341 = vpop.permute.xlu0 %1340
        %v1342 = vrot.slane %v1341, 1
        %v1343 = vsel %vm836, %v1341, %v1342
        %v1345 = vsel %vm831, %v1343, 0.0
        %v1346 = vadd.f32 %v1274, %v1345
        %v1347 = vxor.u32 %v1346, 2147483648
        %v1348 = vmul.f32 %v1347, 1.442695
        %v1349 = vpow.pop %v1348
        %v1350 = vadd.f32 %v1349, 1.0
        %v1351 = vrcp.pop %v1350
        %v1352 = vmul.f32 1.0, %v1351
        %v1354 = vlaneseq
        %v1355 = vshrl.u32 %v1354, 7
        %v1356 = vsub.s32 0, %v1355
        %v1357 = vrot.slane %v1352, %v1356
        %v1358 = vlaneseq
        %v1359 = vshrl.u32 %v1358, 7
        %v1360 = vsub.s32 1, %v1359
        %v1361 = vrot.slane %v1352, %v1360
        %v1362 = vcombine.low %v1357, %v1361
        %v1364 = vmul.f32 %v213, %v1362
        %1365 = vst [vmem:[%s212] sm:$0xff] %v1364
        %p1366 = scmp.lt.s32.totalorder %s17, 1
        %s1367 = scalar_select %p1366, %s17, 1
        %s1368 = smul.addr %s1367, 2
        %s1369 = smul.addr %s1368, 4
        %s1370 = scalar_lea.vmem %s4, %s1369
        // Predicated region
        $region41: #{attention_gate.1} parent=35 // pred_check
          %p1371 = pneg %p124
        $region42: #{attention_gate.1} parent=35 // pred_check_branch
          %1373 = sbr.rel (%p1371) target = $region44
        $region43: #{attention_gate.1} parent=35 // pred_region
          _
        $region44: #{attention_gate.1} parent=35 // pred_fallthru
          _
      $region36: #{attention_gate.1} parent=5 // pred_fallthru
        _
      %p1374 = scmp.le.s32.totalorder 2, %s12
      // Predicated region
      $region45: #{attention_gate.1} parent=5 // pred_check
        %p1375 = pneg %p1374
      $region46: #{attention_gate.1} parent=5 // pred_check_branch
        %1377 = sbr.rel (%p1375) target = $region48
      $region47: #{attention_gate.1} parent=5 // pred_region
        %s1378 = ssub.s32 %s12, 2
        // Predicated region
        $region49: #{attention_gate.1} parent=47 // pred_check
          %p1379 = pneg %p130
        $region50: #{attention_gate.1} parent=47 // pred_check_branch
          %1381 = sbr.rel (%p1379) target = $region52
        $region51: #{attention_gate.1} parent=47 // pred_region
          %p1382 = scmp.lt.s32.totalorder %s18, 1
          %s1383 = scalar_select %p1382, %s18, 1
          %s1384 = smul.addr %s1383, 2
          %s1385 = smul.addr %s1384, 4
          %s1386 = scalar_lea.vmem %s4, %s1385
        $region52: #{attention_gate.1} parent=47 // pred_fallthru
          _
      $region48: #{attention_gate.1} parent=5 // pred_fallthru
        _
    $region6: #{attention_gate.1} parent=1 // loop_footer
      %s16 = sadd.s32 1, %s12
    $region7: #{attention_gate.1} parent=1 // loop_footer_branch
      %11 = sbr.rel target = $region3
    $region8: #{attention_gate.1} parent=1 // loop_exit
      _
    %1387 = vsyncpa [#allocation5], 1
    %s1388 = scalar_lea.sflag [#allocation5], 1
    %1389 = vsyncpa %s1388, 1

</llo_original>
